<compile_context>
chip_gen: v7x
topology: tpu7x:2x2x1
jax: 0.10.0
libtpu: 0.0.40
codegen_flags: <defaults>
</compile_context>

<pallas_src>
import numpy as np
import jax
import jax.numpy as jnp
from jax import lax
from jax.experimental import pallas as pl
from jax.experimental.pallas import tpu as pltpu

# ----------------------------------------------------------------------------
# Scaled-down hyperparameters (small shapes), same structure as the PyTorch module
# (original: sr=2048, fmax=1024, img 256x256, sig_len=4096)
# ----------------------------------------------------------------------------
SR = 1024
FMIN = 20.0
FMAX = 256.0
HOP = 32
BPO = 8
FILTER_SCALE = 1
IMG_H = 64
IMG_W = 64
SIG_LEN = 1024
BS = 2
CH = 3
NB_PAD = 128      # packed filter bank width: real in lanes [0,64), imag in lanes [64,128)
NB_HALF = 64


def create_cqt_kernels(sr, fmin, fmax, bpo, filter_scale):
    """Replicates nnAudio CQT1992v2 kernel bank (periodic hann window, L1 norm)."""
    Q = float(filter_scale) / (2.0 ** (1.0 / bpo) - 1.0)
    n_bins = int(np.ceil(bpo * np.log2(fmax / fmin)))
    freqs = fmin * 2.0 ** (np.arange(n_bins, dtype=np.float64) / bpo)
    fft_len = int(2 ** np.ceil(np.log2(np.ceil(Q * sr / fmin))))
    kernels = np.zeros((n_bins, fft_len), dtype=np.complex128)
    lengths = np.ceil(Q * sr / freqs)
    for k in range(n_bins):
        freq = freqs[k]
        l = int(np.ceil(Q * sr / freq))
        if l % 2 == 1:
            start = int(np.ceil(fft_len / 2.0 - l / 2.0)) - 1
        else:
            start = int(np.ceil(fft_len / 2.0 - l / 2.0))
        n = np.arange(l)
        window = 0.5 - 0.5 * np.cos(2.0 * np.pi * n / l)          # periodic hann
        t = np.arange(-((l + 1) // 2), -((l + 1) // 2) + l)       # np.r_[-l//2 : l//2]
        sig = window * np.exp(1j * 2.0 * np.pi * t * freq / sr) / l
        sig = sig / np.linalg.norm(sig, 1)                         # norm=1 (L1)
        kernels[k, start:start + l] = sig
    return kernels, fft_len, lengths, n_bins


# Static shape constants derived from the CQT configuration --------------------
_KERNELS, FFT_LEN, _LENGTHS, N_BINS = create_cqt_kernels(SR, FMIN, FMAX, BPO, FILTER_SCALE)
K = FFT_LEN                                   # conv1d kernel width (1024 at this config)
assert K % HOP == 0 and N_BINS <= NB_HALF
N_CHUNK = K // HOP                            # 32 hop-wide chunks per frame
L_PAD = SIG_LEN + 2 * (K // 2)                # reflect-padded signal length (2048)
T_FRAMES = (L_PAD - K) // HOP + 1             # number of CQT time frames (33)
T_PAD = -(-T_FRAMES // 8) * 8                 # sublane-aligned frame count (40)
M_ROWS = CH * T_PAD                           # dot M dimension per grid step (120)
SIG_ROWS_PAD = -(-(T_PAD + N_CHUNK - 1) // 8) * 8   # hop-rows incl. padded frames (72)


# ----------------------------------------------------------------------------
# Pallas kernel (hot path): whole spec() for one batch element (3 channels).
#   1) one (120, 1024) @ (1024, 128) bf16 MXU dot, f32 accumulate   (the conv1d)
#   2) lane roll by 64 (XLU) + sqrt (EUP)  -> |CQT| * sqrt(lengths)  (magnitude)
#   3) per channel: two constant 0/1 selection matmuls fuse the nearest-neighbor
#      resize AND the (bin,time)->(h,w) transpose, writing the NCHW image block.
# Rows t >= T_FRAMES and lanes b >= N_BINS are padding; the selection matrices
# have zero columns there, so padding can never leak into the image.
# ----------------------------------------------------------------------------
def cqt_kernel(frames_ref, w_ref, sbin_ref, stime_ref, img_ref):
    acc = jnp.dot(frames_ref[0], w_ref[...],
                  preferred_element_type=jnp.float32)          # (M_ROWS, NB_PAD) f32
    swapped = pltpu.roll(acc, shift=NB_HALF, axis=1)           # imag lanes <-> real lanes (XLU)
    mag = jnp.sqrt(acc * acc + swapped * swapped)              # lanes [0, n_bins) = |CQT|*sqrt(len)
    sbin = sbin_ref[...]                                       # (IMG_H, NB_PAD) 0/1 f32
    stime = stime_ref[...]                                     # (T_PAD, IMG_W)  0/1 f32
    for c in range(CH):                                        # static unroll (3 channels)
        m = mag[c * T_PAD:(c + 1) * T_PAD, :]                  # (T_PAD, NB_PAD), 8-aligned slice
        # v[h, t] = m[t, ri[h]]      (A @ B^T selection dot)
        v = lax.dot_general(sbin, m, (((1,), (1,)), ((), ())),
                            preferred_element_type=jnp.float32)            # (IMG_H, T_PAD)
        # img[h, w] = v[h, ci[w]] = spec[ri[h], ci[w]]   (nearest resize + transpose, fused)
        img_ref[0, c] = jnp.dot(v, stime, preferred_element_type=jnp.float32)


def cqt_pallas(frames, w_packed, s_bin, s_time):
    bs = frames.shape[0]
    return pl.pallas_call(
        cqt_kernel,
        out_shape=jax.ShapeDtypeStruct((bs, CH, IMG_H, IMG_W), jnp.float32),
        grid=(bs,),                                            # (2,) -> even, both v7x TCs busy
        in_specs=[
            pl.BlockSpec((1, M_ROWS, K), lambda b: (b, 0, 0)),        # im2col frames, bf16
            pl.BlockSpec((K, NB_PAD), lambda b: (0, 0)),              # constant map -> resident
            pl.BlockSpec((IMG_H, NB_PAD), lambda b: (0, 0)),          # bin-selection matrix
            pl.BlockSpec((T_PAD, IMG_W), lambda b: (0, 0)),           # time-selection matrix
        ],
        out_specs=pl.BlockSpec((1, CH, IMG_H, IMG_W), lambda b: (b, 0, 0, 0)),
        compiler_params=pltpu.CompilerParams(dimension_semantics=("parallel",)),
    )(frames, w_packed, s_bin, s_time)


# ----------------------------------------------------------------------------
# spec() + forward() of CustomModel_v1
# ----------------------------------------------------------------------------
def spec_forward(x, p):
    bs, ch, sig_len = x.shape
    # x /= max_val folded here as a per-channel signal pre-scale (exact by positive homogeneity
    # of the magnitude, sqrt(lengths) scaling and nearest-neighbor selection).
    sig = (x * p["inv_max"][None, :, None]).reshape(bs * ch, sig_len)   # x.view(-1, sig_len)
    sig = jnp.pad(sig, ((0, 0), (K // 2, K // 2)), mode="reflect")      # CQT center padding
    sig = jnp.pad(sig, ((0, 0), (0, SIG_ROWS_PAD * HOP - L_PAD)))       # zero rows for padded frames
    rows = sig.reshape(bs * ch, SIG_ROWS_PAD, HOP).astype(jnp.bfloat16)
    # im2col in the wrapper: frames[n, t, j*HOP + d] = rows[n, t + j, d].
    # ~0.24 MiB/step in bf16, consumed exactly once and streamed by the BlockSpec pipeline;
    # this buys a single aligned K=1024 MXU dot with zero in-kernel relayout work.
    frames = jnp.concatenate([rows[:, j:j + T_PAD, :] for j in range(N_CHUNK)], axis=-1)
    frames = frames.reshape(bs, M_ROWS, K)                              # rows ordered [ch, t]
    return cqt_pallas(frames, p["w_packed"], p["s_bin"], p["s_time"])   # (bs, 3, H, W), /max_val fused


def model_forward(x, p):
    img = spec_forward(x, p)                               # self.spec(x); x /= self.max_val (fused)
    # TODO(synk): the timm `efficientnet_b0` backbone (num_classes=1) has no clean single-kernel
    # Pallas equivalent; per the perf review the deterministic global-avg-pool + linear stand-in
    # runs in plain XLA (the former standalone Pallas head kernel was pure launch overhead).
    pooled = jnp.mean(img, axis=(2, 3))                    # (bs, 3)
    return pooled @ p["head_w"].T + p["head_b"]            # (bs, 1)


if __name__ == "__main__":
    # Packed CQT filter bank: real | imag in one 128-lane bank, sqrt(length) folded in
    # (exact: sqrt((r*s)^2 + (i*s)^2) == s * sqrt(r^2 + i^2) for s >= 0).
    sqrt_len = np.sqrt(_LENGTHS)[:, None]                               # (n_bins, 1)
    w_np = np.zeros((K, NB_PAD), np.float32)
    w_np[:, :N_BINS] = (_KERNELS.real * sqrt_len).T.astype(np.float32)
    w_np[:, NB_HALF:NB_HALF + N_BINS] = (_KERNELS.imag * sqrt_len).T.astype(np.float32)

    # nearest-interpolate source indices (matches F.interpolate mode='nearest') as constant
    # 0/1 selection matrices -> resize + transpose run as two tiny MXU dots inside the kernel.
    ri = np.clip(np.floor(np.arange(IMG_H) * (N_BINS / IMG_H)), 0, N_BINS - 1).astype(np.int64)
    ci = np.clip(np.floor(np.arange(IMG_W) * (T_FRAMES / IMG_W)), 0, T_FRAMES - 1).astype(np.int64)
    s_bin = np.zeros((IMG_H, NB_PAD), np.float32)
    s_bin[np.arange(IMG_H), ri] = 1.0                                   # s_bin[h, b] = [b == ri[h]]
    s_time = np.zeros((T_PAD, IMG_W), np.float32)
    s_time[ci, np.arange(IMG_W)] = 1.0                                  # s_time[t, w] = [t == ci[w]]

    max_val = np.array([1.4916698, 1.3290482, 4.407391], np.float32)

    key = jax.random.PRNGKey(0)
    k_x, k_w = jax.random.split(key)
    params = dict(
        w_packed=jnp.asarray(w_np, jnp.bfloat16),
        s_bin=jnp.asarray(s_bin),
        s_time=jnp.asarray(s_time),
        inv_max=jnp.asarray(1.0 / max_val),
        head_w=jax.random.normal(k_w, (1, 3), jnp.float32) * 0.1,
        head_b=jnp.zeros((1,), jnp.float32),
    )

    x = jax.random.normal(k_x, (BS, CH, SIG_LEN), jnp.float32)
    out = jax.jit(model_forward)(x, params)
    out = jax.block_until_ready(out)
    assert out.shape == (BS, 1)
    assert bool(jnp.all(jnp.isfinite(out)))
    print("KERNEL_OK")
</pallas_src>

<mosaic_0001>
module attributes {stable_mosaic.version = 11 : i64} {
  func.func @cqt_kernel(%arg0: i32, %arg1: memref<1x120x1024xbf16, #tpu.memory_space<vmem>>, %arg2: memref<1024x128xbf16, #tpu.memory_space<vmem>>, %arg3: memref<64x128xf32, #tpu.memory_space<vmem>>, %arg4: memref<40x64xf32, #tpu.memory_space<vmem>>, %arg5: memref<1x3x64x64xf32, #tpu.memory_space<vmem>>) attributes {dimension_semantics = [#tpu.dimension_semantics<parallel>], iteration_bounds = array<i64: 2>, scalar_prefetch = 0 : i64, scratch_operands = 0 : i64, tpu.core_type = #tpu.core_type<tc>, window_params = [{transform_indices = @transform_0, window_bounds = array<i64: 1, 120, 1024>}, {pipeline_mode = #tpu.pipeline_mode<synchronous>, transform_indices = @transform_1, window_bounds = array<i64: 1024, 128>}, {pipeline_mode = #tpu.pipeline_mode<synchronous>, transform_indices = @transform_2, window_bounds = array<i64: 64, 128>}, {pipeline_mode = #tpu.pipeline_mode<synchronous>, transform_indices = @transform_3, window_bounds = array<i64: 40, 64>}, {transform_indices = @transform_4, window_bounds = array<i64: 1, 3, 64, 64>}]} {
    %c0 = arith.constant 0 : index
    %c0_0 = arith.constant 0 : index
    %c0_1 = arith.constant 0 : index
    %0 = vector.load %arg1[%c0, %c0_0, %c0_1] : memref<1x120x1024xbf16, #tpu.memory_space<vmem>>, vector<1x120x1024xbf16>
    %1 = vector.shape_cast %0 : vector<1x120x1024xbf16> to vector<120x1024xbf16>
    %c0_2 = arith.constant 0 : index
    %c0_3 = arith.constant 0 : index
    %2 = vector.load %arg2[%c0_2, %c0_3] : memref<1024x128xbf16, #tpu.memory_space<vmem>>, vector<1024x128xbf16>
    %cst = arith.constant dense<0.000000e+00> : vector<120x128xf32>
    %3 = tpu.matmul %1, %2, %cst {dimension_numbers = #tpu.dot_dimension_numbers<[1], [0], [0], [1], [0, 0, 1, 1], [], []>} : vector<120x1024xbf16>, vector<1024x128xbf16>, vector<120x128xf32> -> vector<120x128xf32>
    %c64_i32 = arith.constant 64 : i32
    %4 = tpu.dynamic_rotate %3 by %c64_i32 dim 1 : vector<120x128xf32>, i32 -> vector<120x128xf32>
    %5 = arith.mulf %3, %3 : vector<120x128xf32>
    %6 = arith.mulf %4, %4 : vector<120x128xf32>
    %7 = arith.addf %5, %6 : vector<120x128xf32>
    %8 = math.sqrt %7 : vector<120x128xf32>
    %c0_4 = arith.constant 0 : index
    %c0_5 = arith.constant 0 : index
    %9 = vector.load %arg3[%c0_4, %c0_5] : memref<64x128xf32, #tpu.memory_space<vmem>>, vector<64x128xf32>
    %c0_6 = arith.constant 0 : index
    %c0_7 = arith.constant 0 : index
    %10 = vector.load %arg4[%c0_6, %c0_7] : memref<40x64xf32, #tpu.memory_space<vmem>>, vector<40x64xf32>
    %11 = vector.extract_strided_slice %8 {offsets = [0, 0], sizes = [40, 128], strides = [1, 1]} : vector<120x128xf32> to vector<40x128xf32>
    %cst_8 = arith.constant dense<0.000000e+00> : vector<64x40xf32>
    %12 = tpu.matmul %9, %11, %cst_8 {dimension_numbers = #tpu.dot_dimension_numbers<[1], [1], [0], [0], [0, 0, 1, 0], [], []>} : vector<64x128xf32>, vector<40x128xf32>, vector<64x40xf32> -> vector<64x40xf32>
    %cst_9 = arith.constant dense<0.000000e+00> : vector<64x64xf32>
    %13 = tpu.matmul %12, %10, %cst_9 {dimension_numbers = #tpu.dot_dimension_numbers<[1], [0], [0], [1], [0, 0, 1, 1], [], []>} : vector<64x40xf32>, vector<40x64xf32>, vector<64x64xf32> -> vector<64x64xf32>
    %c0_10 = arith.constant 0 : index
    %c0_11 = arith.constant 0 : index
    %c0_12 = arith.constant 0 : index
    %c0_13 = arith.constant 0 : index
    %14 = vector.load %arg5[%c0_10, %c0_11, %c0_12, %c0_13] : memref<1x3x64x64xf32, #tpu.memory_space<vmem>>, vector<1x1x64x64xf32>
    %15 = vector.shape_cast %14 : vector<1x1x64x64xf32> to vector<64x64xf32>
    %16 = vector.shape_cast %13 : vector<64x64xf32> to vector<1x1x64x64xf32>
    tpu.vector_store %arg5[%c0_10, %c0_11, %c0_12, %c0_13], %16 {strides = array<i32>} : memref<1x3x64x64xf32, #tpu.memory_space<vmem>>, vector<1x1x64x64xf32>,
    %17 = vector.extract_strided_slice %8 {offsets = [40, 0], sizes = [40, 128], strides = [1, 1]} : vector<120x128xf32> to vector<40x128xf32>
    %cst_14 = arith.constant dense<0.000000e+00> : vector<64x40xf32>
    %18 = tpu.matmul %9, %17, %cst_14 {dimension_numbers = #tpu.dot_dimension_numbers<[1], [1], [0], [0], [0, 0, 1, 0], [], []>} : vector<64x128xf32>, vector<40x128xf32>, vector<64x40xf32> -> vector<64x40xf32>
    %cst_15 = arith.constant dense<0.000000e+00> : vector<64x64xf32>
    %19 = tpu.matmul %18, %10, %cst_15 {dimension_numbers = #tpu.dot_dimension_numbers<[1], [0], [0], [1], [0, 0, 1, 1], [], []>} : vector<64x40xf32>, vector<40x64xf32>, vector<64x64xf32> -> vector<64x64xf32>
    %c0_16 = arith.constant 0 : index
    %c1 = arith.constant 1 : index
    %c0_17 = arith.constant 0 : index
    %c0_18 = arith.constant 0 : index
    %20 = vector.load %arg5[%c0_16, %c1, %c0_17, %c0_18] : memref<1x3x64x64xf32, #tpu.memory_space<vmem>>, vector<1x1x64x64xf32>
    %21 = vector.shape_cast %20 : vector<1x1x64x64xf32> to vector<64x64xf32>
    %22 = vector.shape_cast %19 : vector<64x64xf32> to vector<1x1x64x64xf32>
    tpu.vector_store %arg5[%c0_16, %c1, %c0_17, %c0_18], %22 {strides = array<i32>} : memref<1x3x64x64xf32, #tpu.memory_space<vmem>>, vector<1x1x64x64xf32>,
    %23 = vector.extract_strided_slice %8 {offsets = [80, 0], sizes = [40, 128], strides = [1, 1]} : vector<120x128xf32> to vector<40x128xf32>
    %cst_19 = arith.constant dense<0.000000e+00> : vector<64x40xf32>
    %24 = tpu.matmul %9, %23, %cst_19 {dimension_numbers = #tpu.dot_dimension_numbers<[1], [1], [0], [0], [0, 0, 1, 0], [], []>} : vector<64x128xf32>, vector<40x128xf32>, vector<64x40xf32> -> vector<64x40xf32>
    %cst_20 = arith.constant dense<0.000000e+00> : vector<64x64xf32>
    %25 = tpu.matmul %24, %10, %cst_20 {dimension_numbers = #tpu.dot_dimension_numbers<[1], [0], [0], [1], [0, 0, 1, 1], [], []>} : vector<64x40xf32>, vector<40x64xf32>, vector<64x64xf32> -> vector<64x64xf32>
    %c0_21 = arith.constant 0 : index
    %c2 = arith.constant 2 : index
    %c0_22 = arith.constant 0 : index
    %c0_23 = arith.constant 0 : index
    %26 = vector.load %arg5[%c0_21, %c2, %c0_22, %c0_23] : memref<1x3x64x64xf32, #tpu.memory_space<vmem>>, vector<1x1x64x64xf32>
    %27 = vector.shape_cast %26 : vector<1x1x64x64xf32> to vector<64x64xf32>
    %28 = vector.shape_cast %25 : vector<64x64xf32> to vector<1x1x64x64xf32>
    tpu.vector_store %arg5[%c0_21, %c2, %c0_22, %c0_23], %28 {strides = array<i32>} : memref<1x3x64x64xf32, #tpu.memory_space<vmem>>, vector<1x1x64x64xf32>,
    return
  }
  func.func @transform_0(%arg0: i32) -> (i32, i32, i32) {
    %c0_i32 = arith.constant 0 : i32
    %c0_i32_0 = arith.constant 0 : i32
    %c0_i32_1 = arith.constant 0 : i32
    return %arg0, %c0_i32, %c0_i32_0 : i32, i32, i32
  }
  func.func @transform_1(%arg0: i32) -> (i32, i32) {
    %c0_i32 = arith.constant 0 : i32
    %c0_i32_0 = arith.constant 0 : i32
    %c0_i32_1 = arith.constant 0 : i32
    return %c0_i32, %c0_i32_0 : i32, i32
  }
  func.func @transform_2(%arg0: i32) -> (i32, i32) {
    %c0_i32 = arith.constant 0 : i32
    %c0_i32_0 = arith.constant 0 : i32
    %c0_i32_1 = arith.constant 0 : i32
    return %c0_i32, %c0_i32_0 : i32, i32
  }
  func.func @transform_3(%arg0: i32) -> (i32, i32) {
    %c0_i32 = arith.constant 0 : i32
    %c0_i32_0 = arith.constant 0 : i32
    %c0_i32_1 = arith.constant 0 : i32
    return %c0_i32, %c0_i32_0 : i32, i32
  }
  func.func @transform_4(%arg0: i32) -> (i32, i32, i32, i32) {
    %c0_i32 = arith.constant 0 : i32
    %c0_i32_0 = arith.constant 0 : i32
    %c0_i32_1 = arith.constant 0 : i32
    %c0_i32_2 = arith.constant 0 : i32
    return %arg0, %c0_i32, %c0_i32_0, %c0_i32_1 : i32, i32, i32, i32
  }
}

</mosaic_0001>

<llo_original>
// kernel: model_forward.1
$region0: #{model_forward.1}
  #allocation0 [shape = 'u32[]', space=smem, size = 0x4, offset = 0x4, fixed_abs, tag = 'smem constant byte address 0x4 - core index']
  #allocation1 [shape = 'u32[144,128]{1,0:T(1,128)}', space=vmem, size = 0x12000, scoped, tag = 'internal scratch']
  %s0 = inlined_call_operand.vmem [shape: bf16[2,120,1024], index: 0, kind: input, shape index: {}]
  %s1 = inlined_call_operand.vmem [shape: bf16[1024,128], index: 1, kind: input, shape index: {}]
  %s2 = inlined_call_operand.vmem [shape: f32[64,128], index: 2, kind: input, shape index: {}]
  %s3 = inlined_call_operand.vmem [shape: f32[40,64], index: 3, kind: input, shape index: {}]
  %s4 = inlined_call_operand.vmem [shape: f32[2,3,64,64], index: 4, kind: output, shape index: {}]
  %s5 = sld [smem:[#allocation0]]
  $region49: #{model_forward.1} parent=0
    _
  %s7 = ssub.s32 1, %s5
  %s8 = scalar_select 0, %s7, %s5
  loop: start=0, step=1, limit=4
  $region2: #{model_forward.1} parent=0 // loop_pre_header
    _
  $region3: #{model_forward.1} parent=0 // loop_header
    %s10 = sphi 0, %s14
    %p11 = scmp.ge.s32.totalorder %s10, 4
    %s20 = sphi 0, %s22
    %s23 = sphi 0, %s20
    %s24 = sphi 0, %s23
    %s40 = sphi 0, %s24
    %s44 = sphi 0, %s44
    %s46 = sphi 0, %s44
    %s47 = sphi 0, %s46
    %s61 = sphi 0, %s47
    %s65 = sphi 0, %s65
    %s67 = sphi 0, %s65
    %s68 = sphi 0, %s67
    %s82 = sphi 0, %s68
    %s86 = sphi 0, %s86
    %s88 = sphi 0, %s86
    %s89 = sphi 0, %s88
    %s103 = sphi 0, %s89
    %s109 = sphi 0, %s111
    %s112 = sphi 0, %s109
    %s113 = sphi 0, %s112
    %s129 = sphi 0, %s113
  $region4: #{model_forward.1} parent=0 // loop_header_branch
    %13 = sbr.rel (%p11) target = $region8
  $region5: #{model_forward.1} parent=0 // loop_body
    %s15 = ssub.s32 %s10, 1
    %s16 = ssub.s32 %s10, 2
    %s17 = sadd.s32 %s10, 1
    %s18 = ssub.s32 %s10, %s17
    %p19 = scmp.eq.s32.totalorder %s18, 0
    %s21 = sadd.s32 %s20, 1
    %s22 = scalar_select %p19, %s20, %s21
    %p25 = pneg %p19
    %p26 = scmp.eq.s32.totalorder %s10, 1
    %p27 = por %p25, %p26
    %p28 = scmp.ne.s32.totalorder %s20, %s23
    %p29 = scmp.eq.s32.totalorder %s10, 0
    %p30 = por %p28, %p29
    %p31 = scmp.ne.s32.totalorder %s20, %s23
    %p32 = scmp.eq.s32.totalorder %s15, 1
    %p33 = por %p31, %p32
    %p34 = scmp.ne.s32.totalorder %s23, %s24
    %p35 = scmp.eq.s32.totalorder %s15, 0
    %p36 = por %p34, %p35
    %p37 = scmp.ne.s32.totalorder %s23, %s24
    %p38 = scmp.eq.s32.totalorder %s16, 1
    %p39 = por %p37, %p38
    %p41 = scmp.ne.s32.totalorder %s24, %s40
    %p42 = scmp.eq.s32.totalorder %s16, 0
    %p43 = por %p41, %p42
    %s45 = sadd.s32 %s44, 1
    %p48 = scmp.eq.s32.totalorder %s10, 1
    %p49 = scmp.ne.s32.totalorder %s44, %s46
    %p50 = scmp.eq.s32.totalorder %s10, 0
    %p51 = por %p49, %p50
    %p52 = scmp.ne.s32.totalorder %s44, %s46
    %p53 = scmp.eq.s32.totalorder %s15, 1
    %p54 = por %p52, %p53
    %p55 = scmp.ne.s32.totalorder %s46, %s47
    %p56 = scmp.eq.s32.totalorder %s15, 0
    %p57 = por %p55, %p56
    %p58 = scmp.ne.s32.totalorder %s46, %s47
    %p59 = scmp.eq.s32.totalorder %s16, 1
    %p60 = por %p58, %p59
    %p62 = scmp.ne.s32.totalorder %s47, %s61
    %p63 = scmp.eq.s32.totalorder %s16, 0
    %p64 = por %p62, %p63
    %s66 = sadd.s32 %s65, 1
    %p69 = scmp.eq.s32.totalorder %s10, 1
    %p70 = scmp.ne.s32.totalorder %s65, %s67
    %p71 = scmp.eq.s32.totalorder %s10, 0
    %p72 = por %p70, %p71
    %p73 = scmp.ne.s32.totalorder %s65, %s67
    %p74 = scmp.eq.s32.totalorder %s15, 1
    %p75 = por %p73, %p74
    %p76 = scmp.ne.s32.totalorder %s67, %s68
    %p77 = scmp.eq.s32.totalorder %s15, 0
    %p78 = por %p76, %p77
    %p79 = scmp.ne.s32.totalorder %s67, %s68
    %p80 = scmp.eq.s32.totalorder %s16, 1
    %p81 = por %p79, %p80
    %p83 = scmp.ne.s32.totalorder %s68, %s82
    %p84 = scmp.eq.s32.totalorder %s16, 0
    %p85 = por %p83, %p84
    %s87 = sadd.s32 %s86, 1
    %p90 = scmp.eq.s32.totalorder %s10, 1
    %p91 = scmp.ne.s32.totalorder %s86, %s88
    %p92 = scmp.eq.s32.totalorder %s10, 0
    %p93 = por %p91, %p92
    %p94 = scmp.ne.s32.totalorder %s86, %s88
    %p95 = scmp.eq.s32.totalorder %s15, 1
    %p96 = por %p94, %p95
    %p97 = scmp.ne.s32.totalorder %s88, %s89
    %p98 = scmp.eq.s32.totalorder %s15, 0
    %p99 = por %p97, %p98
    %p100 = scmp.ne.s32.totalorder %s88, %s89
    %p101 = scmp.eq.s32.totalorder %s16, 1
    %p102 = por %p100, %p101
    %p104 = scmp.ne.s32.totalorder %s89, %s103
    %p105 = scmp.eq.s32.totalorder %s16, 0
    %p106 = por %p104, %p105
    %s107 = ssub.s32 %s10, %s17
    %p108 = scmp.eq.s32.totalorder %s107, 0
    %s110 = sadd.s32 %s109, 1
    %s111 = scalar_select %p108, %s109, %s110
    %p114 = pneg %p108
    %p115 = scmp.eq.s32.totalorder %s10, 1
    %p116 = por %p114, %p115
    %p117 = scmp.ne.s32.totalorder %s109, %s112
    %p118 = scmp.eq.s32.totalorder %s10, 0
    %p119 = por %p117, %p118
    %p120 = scmp.ne.s32.totalorder %s109, %s112
    %p121 = scmp.eq.s32.totalorder %s15, 1
    %p122 = por %p120, %p121
    %p123 = scmp.ne.s32.totalorder %s112, %s113
    %p124 = scmp.eq.s32.totalorder %s15, 0
    %p125 = por %p123, %p124
    %p126 = scmp.ne.s32.totalorder %s112, %s113
    %p127 = scmp.eq.s32.totalorder %s16, 1
    %p128 = por %p126, %p127
    %p130 = scmp.ne.s32.totalorder %s113, %s129
    %p131 = scmp.eq.s32.totalorder %s16, 0
    %p132 = por %p130, %p131
    %p133 = scmp.le.s32.totalorder 1, %s10
    %p134 = scmp.lt.s32.totalorder %s10, 3
    %p135 = pnand %p133, %p134
    %p136 = pneg %p135
    // Predicated region
    $region9: #{model_forward.1} parent=5 // pred_check
      _
    $region10: #{model_forward.1} parent=5 // pred_check_branch
      %138 = sbr.rel (%p135) target = $region12
    $region11: #{model_forward.1} parent=5 // pred_region
      %s139 = ssub.s32 %s10, 1
      // Predicated region
      $region13: #{model_forward.1} parent=11 // pred_check
        %p140 = pneg %p57
      $region14: #{model_forward.1} parent=11 // pred_check_branch
        %142 = sbr.rel (%p140) target = $region16
      $region15: #{model_forward.1} parent=11 // pred_region
        _
      $region16: #{model_forward.1} parent=11 // pred_fallthru
        _
      // Predicated region
      $region17: #{model_forward.1} parent=11 // pred_check
        %p143 = pneg %p78
      $region18: #{model_forward.1} parent=11 // pred_check_branch
        %145 = sbr.rel (%p143) target = $region20
      $region19: #{model_forward.1} parent=11 // pred_region
        _
      $region20: #{model_forward.1} parent=11 // pred_fallthru
        _
      // Predicated region
      $region21: #{model_forward.1} parent=11 // pred_check
        %p146 = pneg %p99
      $region22: #{model_forward.1} parent=11 // pred_check_branch
        %148 = sbr.rel (%p146) target = $region24
      $region23: #{model_forward.1} parent=11 // pred_region
        _
      $region24: #{model_forward.1} parent=11 // pred_fallthru
        _
    $region12: #{model_forward.1} parent=5 // pred_fallthru
      _
    %p149 = scmp.lt.s32.totalorder %s10, 2
    // Predicated region
    $region25: #{model_forward.1} parent=5 // pred_check
      %p150 = pneg %p149
    $region26: #{model_forward.1} parent=5 // pred_check_branch
      %152 = sbr.rel (%p150) target = $region28
    $region27: #{model_forward.1} parent=5 // pred_region
      // Predicated region
      $region29: #{model_forward.1} parent=27 // pred_check
        %p153 = pneg %p30
      $region30: #{model_forward.1} parent=27 // pred_check_branch
        %155 = sbr.rel (%p153) target = $region32
      $region31: #{model_forward.1} parent=27 // pred_region
        %p156 = scmp.lt.s32.totalorder %s10, 1
        %s157 = scalar_select %p156, %s10, 1
        %s158 = smul.addr %s157, 120
        %s159 = smul.addr %s158, 4
        %s160 = scalar_lea.vmem %s0, %s159
      $region32: #{model_forward.1} parent=27 // pred_fallthru
        _
    $region28: #{model_forward.1} parent=5 // pred_fallthru
      _
    %p161 = scmp.le.s32.totalorder 1, %s10
    %p162 = scmp.lt.s32.totalorder %s10, 3
    %p163 = pnand %p161, %p162
    %p164 = pneg %p163
    // Predicated region
    $region33: #{model_forward.1} parent=5 // pred_check
      _
    $region34: #{model_forward.1} parent=5 // pred_check_branch
      %166 = sbr.rel (%p163) target = $region36
    $region35: #{model_forward.1} parent=5 // pred_region
      %s167 = ssub.s32 %s10, 1
      %p168 = scmp.lt.s32.totalorder %s15, 1
      %s169 = scalar_select %p168, %s15, 1
      %s170 = smul.addr %s169, 120
      %s171 = smul.addr %s170, 4
      %s172 = scalar_lea.vmem %s0, %s171
      %p173 = pneg %p36
      %p174 = pneg %p33
      %p175 = pneg %p57
      %p176 = pneg %p54
      %p177 = pneg %p78
      %p178 = pneg %p75
      %p179 = pneg %p99
      %p180 = pneg %p96
      %p181 = pneg %p125
      %p182 = pneg %p122
      %p183 = scmp.lt.s32.totalorder %s15, 1
      %s184 = scalar_select %p183, %s15, 1
      %s185 = smul.addr %s184, 24
      %s186 = smul.addr %s185, 8
      %s187 = scalar_lea.vmem %s4, %s186
      %p188 = scmp.lt.s32.totalorder %s15, 1
      %s189 = scalar_select %p188, %s15, 1
      %s190 = smul.addr %s189, 120
      %s191 = smul.addr %s190, 4
      %s192 = scalar_lea.vmem %s0, %s191
      %p193 = scmp.lt.s32.totalorder %s15, 1
      %s194 = scalar_select %p193, %s15, 1
      %s195 = smul.addr %s194, 24
      %s196 = smul.addr %s195, 8
      %s197 = scalar_lea.vmem %s4, %s196
      %v199 = vld [vmem:[%s192] sm:$0xff]
      %v200 = vld [vmem:[%s192 + $0x8] sm:$0xff]
      %v201 = vld [vmem:[%s192 + $0x10] sm:$0xff]
      %v202 = vld [vmem:[%s192 + $0x18] sm:$0xff]
      %v203 = vld [vmem:[%s192 + $0x20] sm:$0xff]
      %v204 = vld [vmem:[%s192 + $0x28] sm:$0xff]
      %v205 = vld [vmem:[%s192 + $0x30] sm:$0xff]
      %v206 = vld [vmem:[%s192 + $0x38] sm:$0xff]
      %v207 = vld [vmem:[%s192 + $0x40] sm:$0xff]
      %v208 = vld [vmem:[%s192 + $0x48] sm:$0xff]
      %v209 = vld [vmem:[%s192 + $0x50] sm:$0xff]
      %v210 = vld [vmem:[%s192 + $0x58] sm:$0xff]
      %v211 = vld [vmem:[%s192 + $0x60] sm:$0xff]
      %v212 = vld [vmem:[%s192 + $0x68] sm:$0xff]
      %v213 = vld [vmem:[%s192 + $0x70] sm:$0xff]
      %v214 = vld [vmem:[%s192 + $0x78] sm:$0xff]
      %v215 = vld [vmem:[%s192 + $0x80] sm:$0xff]
      %v216 = vld [vmem:[%s192 + $0x88] sm:$0xff]
      %v217 = vld [vmem:[%s192 + $0x90] sm:$0xff]
      %v218 = vld [vmem:[%s192 + $0x98] sm:$0xff]
      %v219 = vld [vmem:[%s192 + $0xa0] sm:$0xff]
      %v220 = vld [vmem:[%s192 + $0xa8] sm:$0xff]
      %v221 = vld [vmem:[%s192 + $0xb0] sm:$0xff]
      %v222 = vld [vmem:[%s192 + $0xb8] sm:$0xff]
      %v223 = vld [vmem:[%s192 + $0xc0] sm:$0xff]
      %v224 = vld [vmem:[%s192 + $0xc8] sm:$0xff]
      %v225 = vld [vmem:[%s192 + $0xd0] sm:$0xff]
      %v226 = vld [vmem:[%s192 + $0xd8] sm:$0xff]
      %v227 = vld [vmem:[%s192 + $0xe0] sm:$0xff]
      %v228 = vld [vmem:[%s192 + $0xe8] sm:$0xff]
      %v229 = vld [vmem:[%s192 + $0xf0] sm:$0xff]
      %v230 = vld [vmem:[%s192 + $0xf8] sm:$0xff]
      %v231 = vld [vmem:[%s192 + $0x100] sm:$0xff]
      %v232 = vld [vmem:[%s192 + $0x108] sm:$0xff]
      %v233 = vld [vmem:[%s192 + $0x110] sm:$0xff]
      %v234 = vld [vmem:[%s192 + $0x118] sm:$0xff]
      %v235 = vld [vmem:[%s192 + $0x120] sm:$0xff]
      %v236 = vld [vmem:[%s192 + $0x128] sm:$0xff]
      %v237 = vld [vmem:[%s192 + $0x130] sm:$0xff]
      %v238 = vld [vmem:[%s192 + $0x138] sm:$0xff]
      %v239 = vld [vmem:[%s192 + $0x140] sm:$0xff]
      %v240 = vld [vmem:[%s192 + $0x148] sm:$0xff]
      %v241 = vld [vmem:[%s192 + $0x150] sm:$0xff]
      %v242 = vld [vmem:[%s192 + $0x158] sm:$0xff]
      %v243 = vld [vmem:[%s192 + $0x160] sm:$0xff]
      %v244 = vld [vmem:[%s192 + $0x168] sm:$0xff]
      %v245 = vld [vmem:[%s192 + $0x170] sm:$0xff]
      %v246 = vld [vmem:[%s192 + $0x178] sm:$0xff]
      %v247 = vld [vmem:[%s192 + $0x180] sm:$0xff]
      %v248 = vld [vmem:[%s192 + $0x188] sm:$0xff]
      %v249 = vld [vmem:[%s192 + $0x190] sm:$0xff]
      %v250 = vld [vmem:[%s192 + $0x198] sm:$0xff]
      %v251 = vld [vmem:[%s192 + $0x1a0] sm:$0xff]
      %v252 = vld [vmem:[%s192 + $0x1a8] sm:$0xff]
      %v253 = vld [vmem:[%s192 + $0x1b0] sm:$0xff]
      %v254 = vld [vmem:[%s192 + $0x1b8] sm:$0xff]
      %v255 = vld [vmem:[%s192 + $0x1c0] sm:$0xff]
      %v256 = vld [vmem:[%s192 + $0x1c8] sm:$0xff]
      %v257 = vld [vmem:[%s192 + $0x1d0] sm:$0xff]
      %v258 = vld [vmem:[%s192 + $0x1d8] sm:$0xff]
      %v259 = vld [vmem:[%s1] sm:$0xf]
      %v260 = vld [vmem:[%s1 + $0x4] sm:$0xf]
      %v261 = vld [vmem:[%s1 + $0x8] sm:$0xf]
      %v262 = vld [vmem:[%s1 + $0xc] sm:$0xf]
      %v263 = vld [vmem:[%s1 + $0x10] sm:$0xf]
      %v264 = vld [vmem:[%s1 + $0x14] sm:$0xf]
      %v265 = vld [vmem:[%s1 + $0x18] sm:$0xf]
      %v266 = vld [vmem:[%s1 + $0x1c] sm:$0xf]
      %v267 = vld [vmem:[%s1 + $0x20] sm:$0xf]
      %v268 = vld [vmem:[%s1 + $0x24] sm:$0xf]
      %v269 = vld [vmem:[%s1 + $0x28] sm:$0xf]
      %v270 = vld [vmem:[%s1 + $0x2c] sm:$0xf]
      %v271 = vld [vmem:[%s1 + $0x30] sm:$0xf]
      %v272 = vld [vmem:[%s1 + $0x34] sm:$0xf]
      %v273 = vld [vmem:[%s1 + $0x38] sm:$0xf]
      %v274 = vld [vmem:[%s1 + $0x3c] sm:$0xf]
      %v275 = vld [vmem:[%s1 + $0x40] sm:$0xf]
      %v276 = vld [vmem:[%s1 + $0x44] sm:$0xf]
      %v277 = vld [vmem:[%s1 + $0x48] sm:$0xf]
      %v278 = vld [vmem:[%s1 + $0x4c] sm:$0xf]
      %v279 = vld [vmem:[%s1 + $0x50] sm:$0xf]
      %v280 = vld [vmem:[%s1 + $0x54] sm:$0xf]
      %v281 = vld [vmem:[%s1 + $0x58] sm:$0xf]
      %v282 = vld [vmem:[%s1 + $0x5c] sm:$0xf]
      %v283 = vld [vmem:[%s1 + $0x60] sm:$0xf]
      %v284 = vld [vmem:[%s1 + $0x64] sm:$0xf]
      %v285 = vld [vmem:[%s1 + $0x68] sm:$0xf]
      %v286 = vld [vmem:[%s1 + $0x6c] sm:$0xf]
      %v287 = vld [vmem:[%s1 + $0x70] sm:$0xf]
      %v288 = vld [vmem:[%s1 + $0x74] sm:$0xf]
      %v289 = vld [vmem:[%s1 + $0x78] sm:$0xf]
      %v290 = vld [vmem:[%s1 + $0x7c] sm:$0xf]
      %v291 = vld [vmem:[%s1 + $0x80] sm:$0xf]
      %v292 = vld [vmem:[%s1 + $0x84] sm:$0xf]
      %v293 = vld [vmem:[%s1 + $0x88] sm:$0xf]
      %v294 = vld [vmem:[%s1 + $0x8c] sm:$0xf]
      %v295 = vld [vmem:[%s1 + $0x90] sm:$0xf]
      %v296 = vld [vmem:[%s1 + $0x94] sm:$0xf]
      %v297 = vld [vmem:[%s1 + $0x98] sm:$0xf]
      %v298 = vld [vmem:[%s1 + $0x9c] sm:$0xf]
      %v299 = vld [vmem:[%s1 + $0xa0] sm:$0xf]
      %v300 = vld [vmem:[%s1 + $0xa4] sm:$0xf]
      %v301 = vld [vmem:[%s1 + $0xa8] sm:$0xf]
      %v302 = vld [vmem:[%s1 + $0xac] sm:$0xf]
      %v303 = vld [vmem:[%s1 + $0xb0] sm:$0xf]
      %v304 = vld [vmem:[%s1 + $0xb4] sm:$0xf]
      %v305 = vld [vmem:[%s1 + $0xb8] sm:$0xf]
      %v306 = vld [vmem:[%s1 + $0xbc] sm:$0xf]
      %v307 = vld [vmem:[%s1 + $0xc0] sm:$0xf]
      %v308 = vld [vmem:[%s1 + $0xc4] sm:$0xf]
      %v309 = vld [vmem:[%s1 + $0xc8] sm:$0xf]
      %v310 = vld [vmem:[%s1 + $0xcc] sm:$0xf]
      %v311 = vld [vmem:[%s1 + $0xd0] sm:$0xf]
      %v312 = vld [vmem:[%s1 + $0xd4] sm:$0xf]
      %v313 = vld [vmem:[%s1 + $0xd8] sm:$0xf]
      %v314 = vld [vmem:[%s1 + $0xdc] sm:$0xf]
      %v315 = vld [vmem:[%s1 + $0xe0] sm:$0xf]
      %v316 = vld [vmem:[%s1 + $0xe4] sm:$0xf]
      %v317 = vld [vmem:[%s1 + $0xe8] sm:$0xf]
      %v318 = vld [vmem:[%s1 + $0xec] sm:$0xf]
      %v319 = vld [vmem:[%s1 + $0xf0] sm:$0xf]
      %v320 = vld [vmem:[%s1 + $0xf4] sm:$0xf]
      %v321 = vld [vmem:[%s1 + $0xf8] sm:$0xf]
      %v322 = vld [vmem:[%s1 + $0xfc] sm:$0xf]
      %v323 = vld [vmem:[%s1 + $0x100] sm:$0xf]
      %v324 = vld [vmem:[%s1 + $0x104] sm:$0xf]
      %v325 = vld [vmem:[%s1 + $0x108] sm:$0xf]
      %v326 = vld [vmem:[%s1 + $0x10c] sm:$0xf]
      %v327 = vld [vmem:[%s1 + $0x110] sm:$0xf]
      %v328 = vld [vmem:[%s1 + $0x114] sm:$0xf]
      %v329 = vld [vmem:[%s1 + $0x118] sm:$0xf]
      %v330 = vld [vmem:[%s1 + $0x11c] sm:$0xf]
      %v331 = vld [vmem:[%s1 + $0x120] sm:$0xf]
      %v332 = vld [vmem:[%s1 + $0x124] sm:$0xf]
      %v333 = vld [vmem:[%s1 + $0x128] sm:$0xf]
      %v334 = vld [vmem:[%s1 + $0x12c] sm:$0xf]
      %v335 = vld [vmem:[%s1 + $0x130] sm:$0xf]
      %v336 = vld [vmem:[%s1 + $0x134] sm:$0xf]
      %v337 = vld [vmem:[%s1 + $0x138] sm:$0xf]
      %v338 = vld [vmem:[%s1 + $0x13c] sm:$0xf]
      %v339 = vld [vmem:[%s1 + $0x140] sm:$0xf]
      %v340 = vld [vmem:[%s1 + $0x144] sm:$0xf]
      %v341 = vld [vmem:[%s1 + $0x148] sm:$0xf]
      %v342 = vld [vmem:[%s1 + $0x14c] sm:$0xf]
      %v343 = vld [vmem:[%s1 + $0x150] sm:$0xf]
      %v344 = vld [vmem:[%s1 + $0x154] sm:$0xf]
      %v345 = vld [vmem:[%s1 + $0x158] sm:$0xf]
      %v346 = vld [vmem:[%s1 + $0x15c] sm:$0xf]
      %v347 = vld [vmem:[%s1 + $0x160] sm:$0xf]
      %v348 = vld [vmem:[%s1 + $0x164] sm:$0xf]
      %v349 = vld [vmem:[%s1 + $0x168] sm:$0xf]
      %v350 = vld [vmem:[%s1 + $0x16c] sm:$0xf]
      %v351 = vld [vmem:[%s1 + $0x170] sm:$0xf]
      %v352 = vld [vmem:[%s1 + $0x174] sm:$0xf]
      %v353 = vld [vmem:[%s1 + $0x178] sm:$0xf]
      %v354 = vld [vmem:[%s1 + $0x17c] sm:$0xf]
      %v355 = vld [vmem:[%s1 + $0x180] sm:$0xf]
      %v356 = vld [vmem:[%s1 + $0x184] sm:$0xf]
      %v357 = vld [vmem:[%s1 + $0x188] sm:$0xf]
      %v358 = vld [vmem:[%s1 + $0x18c] sm:$0xf]
      %v359 = vld [vmem:[%s1 + $0x190] sm:$0xf]
      %v360 = vld [vmem:[%s1 + $0x194] sm:$0xf]
      %v361 = vld [vmem:[%s1 + $0x198] sm:$0xf]
      %v362 = vld [vmem:[%s1 + $0x19c] sm:$0xf]
      %v363 = vld [vmem:[%s1 + $0x1a0] sm:$0xf]
      %v364 = vld [vmem:[%s1 + $0x1a4] sm:$0xf]
      %v365 = vld [vmem:[%s1 + $0x1a8] sm:$0xf]
      %v366 = vld [vmem:[%s1 + $0x1ac] sm:$0xf]
      %v367 = vld [vmem:[%s1 + $0x1b0] sm:$0xf]
      %v368 = vld [vmem:[%s1 + $0x1b4] sm:$0xf]
      %v369 = vld [vmem:[%s1 + $0x1b8] sm:$0xf]
      %v370 = vld [vmem:[%s1 + $0x1bc] sm:$0xf]
      %v371 = vld [vmem:[%s1 + $0x1c0] sm:$0xf]
      %v372 = vld [vmem:[%s1 + $0x1c4] sm:$0xf]
      %v373 = vld [vmem:[%s1 + $0x1c8] sm:$0xf]
      %v374 = vld [vmem:[%s1 + $0x1cc] sm:$0xf]
      %v375 = vld [vmem:[%s1 + $0x1d0] sm:$0xf]
      %v376 = vld [vmem:[%s1 + $0x1d4] sm:$0xf]
      %v377 = vld [vmem:[%s1 + $0x1d8] sm:$0xf]
      %v378 = vld [vmem:[%s1 + $0x1dc] sm:$0xf]
      %v379 = vld [vmem:[%s1 + $0x1e0] sm:$0xf]
      %v380 = vld [vmem:[%s1 + $0x1e4] sm:$0xf]
      %v381 = vld [vmem:[%s1 + $0x1e8] sm:$0xf]
      %v382 = vld [vmem:[%s1 + $0x1ec] sm:$0xf]
      %v383 = vld [vmem:[%s1 + $0x1f0] sm:$0xf]
      %v384 = vld [vmem:[%s1 + $0x1f4] sm:$0xf]
      %v385 = vld [vmem:[%s1 + $0x1f8] sm:$0xf]
      %v386 = vld [vmem:[%s1 + $0x1fc] sm:$0xf]
      %v447 = vunpack.c.l.b16 %v199
      %v448 = vunpack.c.h.b16 %v199
      %v449 = vunpack.c.l.b16 %v200
      %v450 = vunpack.c.h.b16 %v200
      %v451 = vunpack.c.l.b16 %v201
      %v452 = vunpack.c.h.b16 %v201
      %v453 = vunpack.c.l.b16 %v202
      %v454 = vunpack.c.h.b16 %v202
      %v455 = vunpack.c.l.b16 %v203
      %v456 = vunpack.c.h.b16 %v203
      %v457 = vunpack.c.l.b16 %v204
      %v458 = vunpack.c.h.b16 %v204
      %v459 = vunpack.c.l.b16 %v205
      %v460 = vunpack.c.h.b16 %v205
      %v461 = vunpack.c.l.b16 %v206
      %v462 = vunpack.c.h.b16 %v206
      %v463 = vunpack.c.l.b16 %v207
      %v464 = vunpack.c.h.b16 %v207
      %v465 = vunpack.c.l.b16 %v208
      %v466 = vunpack.c.h.b16 %v208
      %v467 = vunpack.c.l.b16 %v209
      %v468 = vunpack.c.h.b16 %v209
      %v469 = vunpack.c.l.b16 %v210
      %v470 = vunpack.c.h.b16 %v210
      %v471 = vunpack.c.l.b16 %v211
      %v472 = vunpack.c.h.b16 %v211
      %v473 = vunpack.c.l.b16 %v212
      %v474 = vunpack.c.h.b16 %v212
      %v475 = vunpack.c.l.b16 %v213
      %v476 = vunpack.c.h.b16 %v213
      %v477 = vunpack.c.l.b16 %v214
      %v478 = vunpack.c.h.b16 %v214
      %v479 = vunpack.c.l.b16 %v215
      %v480 = vunpack.c.h.b16 %v215
      %v481 = vunpack.c.l.b16 %v216
      %v482 = vunpack.c.h.b16 %v216
      %v483 = vunpack.c.l.b16 %v217
      %v484 = vunpack.c.h.b16 %v217
      %v485 = vunpack.c.l.b16 %v218
      %v486 = vunpack.c.h.b16 %v218
      %v487 = vunpack.c.l.b16 %v219
      %v488 = vunpack.c.h.b16 %v219
      %v489 = vunpack.c.l.b16 %v220
      %v490 = vunpack.c.h.b16 %v220
      %v491 = vunpack.c.l.b16 %v221
      %v492 = vunpack.c.h.b16 %v221
      %v493 = vunpack.c.l.b16 %v222
      %v494 = vunpack.c.h.b16 %v222
      %v495 = vunpack.c.l.b16 %v223
      %v496 = vunpack.c.h.b16 %v223
      %v497 = vunpack.c.l.b16 %v224
      %v498 = vunpack.c.h.b16 %v224
      %v499 = vunpack.c.l.b16 %v225
      %v500 = vunpack.c.h.b16 %v225
      %v501 = vunpack.c.l.b16 %v226
      %v502 = vunpack.c.h.b16 %v226
      %v503 = vunpack.c.l.b16 %v227
      %v504 = vunpack.c.h.b16 %v227
      %v505 = vunpack.c.l.b16 %v228
      %v506 = vunpack.c.h.b16 %v228
      %v507 = vunpack.c.l.b16 %v229
      %v508 = vunpack.c.h.b16 %v229
      %v509 = vunpack.c.l.b16 %v230
      %v510 = vunpack.c.h.b16 %v230
      %v511 = vunpack.c.l.b16 %v231
      %v512 = vunpack.c.h.b16 %v231
      %v513 = vunpack.c.l.b16 %v232
      %v514 = vunpack.c.h.b16 %v232
      %v515 = vunpack.c.l.b16 %v233
      %v516 = vunpack.c.h.b16 %v233
      %v517 = vunpack.c.l.b16 %v234
      %v518 = vunpack.c.h.b16 %v234
      %v519 = vunpack.c.l.b16 %v235
      %v520 = vunpack.c.h.b16 %v235
      %v521 = vunpack.c.l.b16 %v236
      %v522 = vunpack.c.h.b16 %v236
      %v523 = vunpack.c.l.b16 %v237
      %v524 = vunpack.c.h.b16 %v237
      %v525 = vunpack.c.l.b16 %v238
      %v526 = vunpack.c.h.b16 %v238
      %v527 = vunpack.c.l.b16 %v239
      %v528 = vunpack.c.h.b16 %v239
      %v529 = vunpack.c.l.b16 %v240
      %v530 = vunpack.c.h.b16 %v240
      %v531 = vunpack.c.l.b16 %v241
      %v532 = vunpack.c.h.b16 %v241
      %v533 = vunpack.c.l.b16 %v242
      %v534 = vunpack.c.h.b16 %v242
      %v535 = vunpack.c.l.b16 %v243
      %v536 = vunpack.c.h.b16 %v243
      %v537 = vunpack.c.l.b16 %v244
      %v538 = vunpack.c.h.b16 %v244
      %v539 = vunpack.c.l.b16 %v245
      %v540 = vunpack.c.h.b16 %v245
      %v541 = vunpack.c.l.b16 %v246
      %v542 = vunpack.c.h.b16 %v246
      %v543 = vunpack.c.l.b16 %v247
      %v544 = vunpack.c.h.b16 %v247
      %v545 = vunpack.c.l.b16 %v248
      %v546 = vunpack.c.h.b16 %v248
      %v547 = vunpack.c.l.b16 %v249
      %v548 = vunpack.c.h.b16 %v249
      %v549 = vunpack.c.l.b16 %v250
      %v550 = vunpack.c.h.b16 %v250
      %v551 = vunpack.c.l.b16 %v251
      %v552 = vunpack.c.h.b16 %v251
      %v553 = vunpack.c.l.b16 %v252
      %v554 = vunpack.c.h.b16 %v252
      %v555 = vunpack.c.l.b16 %v253
      %v556 = vunpack.c.h.b16 %v253
      %v557 = vunpack.c.l.b16 %v254
      %v558 = vunpack.c.h.b16 %v254
      %v559 = vunpack.c.l.b16 %v255
      %v560 = vunpack.c.h.b16 %v255
      %v561 = vunpack.c.l.b16 %v256
      %v562 = vunpack.c.h.b16 %v256
      %v563 = vunpack.c.l.b16 %v257
      %v564 = vunpack.c.h.b16 %v257
      %v565 = vunpack.c.l.b16 %v258
      %v566 = vunpack.c.h.b16 %v258
      %v567 = vpack.c.b16 %v455, %v447
      %v568 = vpack.c.b16 %v456, %v448
      %v569 = vpack.c.b16 %v457, %v449
      %v570 = vpack.c.b16 %v458, %v450
      %v571 = vpack.c.b16 %v459, %v451
      %v572 = vpack.c.b16 %v460, %v452
      %v573 = vpack.c.b16 %v461, %v453
      %v574 = vpack.c.b16 %v462, %v454
      %v575 = vpack.c.b16 %v471, %v463
      %v576 = vpack.c.b16 %v472, %v464
      %v577 = vpack.c.b16 %v473, %v465
      %v578 = vpack.c.b16 %v474, %v466
      %v579 = vpack.c.b16 %v475, %v467
      %v580 = vpack.c.b16 %v476, %v468
      %v581 = vpack.c.b16 %v477, %v469
      %v582 = vpack.c.b16 %v478, %v470
      %v583 = vpack.c.b16 %v487, %v479
      %v584 = vpack.c.b16 %v488, %v480
      %v585 = vpack.c.b16 %v489, %v481
      %v586 = vpack.c.b16 %v490, %v482
      %v587 = vpack.c.b16 %v491, %v483
      %v588 = vpack.c.b16 %v492, %v484
      %v589 = vpack.c.b16 %v493, %v485
      %v590 = vpack.c.b16 %v494, %v486
      %v591 = vpack.c.b16 %v503, %v495
      %v592 = vpack.c.b16 %v504, %v496
      %v593 = vpack.c.b16 %v505, %v497
      %v594 = vpack.c.b16 %v506, %v498
      %v595 = vpack.c.b16 %v507, %v499
      %v596 = vpack.c.b16 %v508, %v500
      %v597 = vpack.c.b16 %v509, %v501
      %v598 = vpack.c.b16 %v510, %v502
      %v599 = vpack.c.b16 %v519, %v511
      %v600 = vpack.c.b16 %v520, %v512
      %v601 = vpack.c.b16 %v521, %v513
      %v602 = vpack.c.b16 %v522, %v514
      %v603 = vpack.c.b16 %v523, %v515
      %v604 = vpack.c.b16 %v524, %v516
      %v605 = vpack.c.b16 %v525, %v517
      %v606 = vpack.c.b16 %v526, %v518
      %v607 = vpack.c.b16 %v535, %v527
      %v608 = vpack.c.b16 %v536, %v528
      %v609 = vpack.c.b16 %v537, %v529
      %v610 = vpack.c.b16 %v538, %v530
      %v611 = vpack.c.b16 %v539, %v531
      %v612 = vpack.c.b16 %v540, %v532
      %v613 = vpack.c.b16 %v541, %v533
      %v614 = vpack.c.b16 %v542, %v534
      %v615 = vpack.c.b16 %v551, %v543
      %v616 = vpack.c.b16 %v552, %v544
      %v617 = vpack.c.b16 %v553, %v545
      %v618 = vpack.c.b16 %v554, %v546
      %v619 = vpack.c.b16 %v555, %v547
      %v620 = vpack.c.b16 %v556, %v548
      %v621 = vpack.c.b16 %v557, %v549
      %v622 = vpack.c.b16 %v558, %v550
      %v623 = vpack.c.b16 %v559, %v559
      %v624 = vpack.c.b16 %v560, %v560
      %v625 = vpack.c.b16 %v561, %v561
      %v626 = vpack.c.b16 %v562, %v562
      %v627 = vpack.c.b16 %v563, %v563
      %v628 = vpack.c.b16 %v564, %v564
      %v629 = vpack.c.b16 %v565, %v565
      %v630 = vpack.c.b16 %v566, %v566
      %v823 = vunpack.c.l.b16 %v259
      %v824 = vunpack.c.l.b16 %v260
      %v825 = vunpack.c.l.b16 %v261
      %v826 = vunpack.c.l.b16 %v262
      %v827 = vunpack.c.l.b16 %v263
      %v828 = vunpack.c.l.b16 %v264
      %v829 = vunpack.c.l.b16 %v265
      %v830 = vunpack.c.l.b16 %v266
      %v831 = vunpack.c.l.b16 %v267
      %v832 = vunpack.c.l.b16 %v268
      %v833 = vunpack.c.l.b16 %v269
      %v834 = vunpack.c.l.b16 %v270
      %v835 = vunpack.c.l.b16 %v271
      %v836 = vunpack.c.l.b16 %v272
      %v837 = vunpack.c.l.b16 %v273
      %v838 = vunpack.c.l.b16 %v274
      %v839 = vunpack.c.l.b16 %v275
      %v840 = vunpack.c.l.b16 %v276
      %v841 = vunpack.c.l.b16 %v277
      %v842 = vunpack.c.l.b16 %v278
      %v843 = vunpack.c.l.b16 %v279
      %v844 = vunpack.c.l.b16 %v280
      %v845 = vunpack.c.l.b16 %v281
      %v846 = vunpack.c.l.b16 %v282
      %v847 = vunpack.c.l.b16 %v283
      %v848 = vunpack.c.l.b16 %v284
      %v849 = vunpack.c.l.b16 %v285
      %v850 = vunpack.c.l.b16 %v286
      %v851 = vunpack.c.l.b16 %v287
      %v852 = vunpack.c.l.b16 %v288
      %v853 = vunpack.c.l.b16 %v289
      %v854 = vunpack.c.l.b16 %v290
      %v855 = vunpack.c.l.b16 %v291
      %v856 = vunpack.c.l.b16 %v292
      %v857 = vunpack.c.l.b16 %v293
      %v858 = vunpack.c.l.b16 %v294
      %v859 = vunpack.c.l.b16 %v295
      %v860 = vunpack.c.l.b16 %v296
      %v861 = vunpack.c.l.b16 %v297
      %v862 = vunpack.c.l.b16 %v298
      %v863 = vunpack.c.l.b16 %v299
      %v864 = vunpack.c.l.b16 %v300
      %v865 = vunpack.c.l.b16 %v301
      %v866 = vunpack.c.l.b16 %v302
      %v867 = vunpack.c.l.b16 %v303
      %v868 = vunpack.c.l.b16 %v304
      %v869 = vunpack.c.l.b16 %v305
      %v870 = vunpack.c.l.b16 %v306
      %v871 = vunpack.c.l.b16 %v307
      %v872 = vunpack.c.l.b16 %v308
      %v873 = vunpack.c.l.b16 %v309
      %v874 = vunpack.c.l.b16 %v310
      %v875 = vunpack.c.l.b16 %v311
      %v876 = vunpack.c.l.b16 %v312
      %v877 = vunpack.c.l.b16 %v313
      %v878 = vunpack.c.l.b16 %v314
      %v879 = vunpack.c.l.b16 %v315
      %v880 = vunpack.c.l.b16 %v316
      %v881 = vunpack.c.l.b16 %v317
      %v882 = vunpack.c.l.b16 %v318
      %v883 = vunpack.c.l.b16 %v319
      %v884 = vunpack.c.l.b16 %v320
      %v885 = vunpack.c.l.b16 %v321
      %v886 = vunpack.c.l.b16 %v322
      %v887 = vunpack.c.l.b16 %v323
      %v888 = vunpack.c.l.b16 %v324
      %v889 = vunpack.c.l.b16 %v325
      %v890 = vunpack.c.l.b16 %v326
      %v891 = vunpack.c.l.b16 %v327
      %v892 = vunpack.c.l.b16 %v328
      %v893 = vunpack.c.l.b16 %v329
      %v894 = vunpack.c.l.b16 %v330
      %v895 = vunpack.c.l.b16 %v331
      %v896 = vunpack.c.l.b16 %v332
      %v897 = vunpack.c.l.b16 %v333
      %v898 = vunpack.c.l.b16 %v334
      %v899 = vunpack.c.l.b16 %v335
      %v900 = vunpack.c.l.b16 %v336
      %v901 = vunpack.c.l.b16 %v337
      %v902 = vunpack.c.l.b16 %v338
      %v903 = vunpack.c.l.b16 %v339
      %v904 = vunpack.c.l.b16 %v340
      %v905 = vunpack.c.l.b16 %v341
      %v906 = vunpack.c.l.b16 %v342
      %v907 = vunpack.c.l.b16 %v343
      %v908 = vunpack.c.l.b16 %v344
      %v909 = vunpack.c.l.b16 %v345
      %v910 = vunpack.c.l.b16 %v346
      %v911 = vunpack.c.l.b16 %v347
      %v912 = vunpack.c.l.b16 %v348
      %v913 = vunpack.c.l.b16 %v349
      %v914 = vunpack.c.l.b16 %v350
      %v915 = vunpack.c.l.b16 %v351
      %v916 = vunpack.c.l.b16 %v352
      %v917 = vunpack.c.l.b16 %v353
      %v918 = vunpack.c.l.b16 %v354
      %v919 = vunpack.c.l.b16 %v355
      %v920 = vunpack.c.l.b16 %v356
      %v921 = vunpack.c.l.b16 %v357
      %v922 = vunpack.c.l.b16 %v358
      %v923 = vunpack.c.l.b16 %v359
      %v924 = vunpack.c.l.b16 %v360
      %v925 = vunpack.c.l.b16 %v361
      %v926 = vunpack.c.l.b16 %v362
      %v927 = vunpack.c.l.b16 %v363
      %v928 = vunpack.c.l.b16 %v364
      %v929 = vunpack.c.l.b16 %v365
      %v930 = vunpack.c.l.b16 %v366
      %v931 = vunpack.c.l.b16 %v367
      %v932 = vunpack.c.l.b16 %v368
      %v933 = vunpack.c.l.b16 %v369
      %v934 = vunpack.c.l.b16 %v370
      %v935 = vunpack.c.l.b16 %v371
      %v936 = vunpack.c.l.b16 %v372
      %v937 = vunpack.c.l.b16 %v373
      %v938 = vunpack.c.l.b16 %v374
      %v939 = vunpack.c.l.b16 %v375
      %v940 = vunpack.c.l.b16 %v376
      %v941 = vunpack.c.l.b16 %v377
      %v942 = vunpack.c.l.b16 %v378
      %v943 = vunpack.c.l.b16 %v379
      %v944 = vunpack.c.l.b16 %v380
      %v945 = vunpack.c.l.b16 %v381
      %v946 = vunpack.c.l.b16 %v382
      %v947 = vunpack.c.l.b16 %v383
      %v948 = vunpack.c.l.b16 %v384
      %v949 = vunpack.c.l.b16 %v385
      %v950 = vunpack.c.l.b16 %v386
      %v951 = vpack.c.b16 %v824, %v823
      %v952 = vpack.c.b16 %v826, %v825
      %v953 = vpack.c.b16 %v828, %v827
      %v954 = vpack.c.b16 %v830, %v829
      %v955 = vpack.c.b16 %v832, %v831
      %v956 = vpack.c.b16 %v834, %v833
      %v957 = vpack.c.b16 %v836, %v835
      %v958 = vpack.c.b16 %v838, %v837
      %v959 = vpack.c.b16 %v840, %v839
      %v960 = vpack.c.b16 %v842, %v841
      %v961 = vpack.c.b16 %v844, %v843
      %v962 = vpack.c.b16 %v846, %v845
      %v963 = vpack.c.b16 %v848, %v847
      %v964 = vpack.c.b16 %v850, %v849
      %v965 = vpack.c.b16 %v852, %v851
      %v966 = vpack.c.b16 %v854, %v853
      %v967 = vpack.c.b16 %v856, %v855
      %v968 = vpack.c.b16 %v858, %v857
      %v969 = vpack.c.b16 %v860, %v859
      %v970 = vpack.c.b16 %v862, %v861
      %v971 = vpack.c.b16 %v864, %v863
      %v972 = vpack.c.b16 %v866, %v865
      %v973 = vpack.c.b16 %v868, %v867
      %v974 = vpack.c.b16 %v870, %v869
      %v975 = vpack.c.b16 %v872, %v871
      %v976 = vpack.c.b16 %v874, %v873
      %v977 = vpack.c.b16 %v876, %v875
      %v978 = vpack.c.b16 %v878, %v877
      %v979 = vpack.c.b16 %v880, %v879
      %v980 = vpack.c.b16 %v882, %v881
      %v981 = vpack.c.b16 %v884, %v883
      %v982 = vpack.c.b16 %v886, %v885
      %v983 = vpack.c.b16 %v888, %v887
      %v984 = vpack.c.b16 %v890, %v889
      %v985 = vpack.c.b16 %v892, %v891
      %v986 = vpack.c.b16 %v894, %v893
      %v987 = vpack.c.b16 %v896, %v895
      %v988 = vpack.c.b16 %v898, %v897
      %v989 = vpack.c.b16 %v900, %v899
      %v990 = vpack.c.b16 %v902, %v901
      %v991 = vpack.c.b16 %v904, %v903
      %v992 = vpack.c.b16 %v906, %v905
      %v993 = vpack.c.b16 %v908, %v907
      %v994 = vpack.c.b16 %v910, %v909
      %v995 = vpack.c.b16 %v912, %v911
      %v996 = vpack.c.b16 %v914, %v913
      %v997 = vpack.c.b16 %v916, %v915
      %v998 = vpack.c.b16 %v918, %v917
      %v999 = vpack.c.b16 %v920, %v919
      %v1000 = vpack.c.b16 %v922, %v921
      %v1001 = vpack.c.b16 %v924, %v923
      %v1002 = vpack.c.b16 %v926, %v925
      %v1003 = vpack.c.b16 %v928, %v927
      %v1004 = vpack.c.b16 %v930, %v929
      %v1005 = vpack.c.b16 %v932, %v931
      %v1006 = vpack.c.b16 %v934, %v933
      %v1007 = vpack.c.b16 %v936, %v935
      %v1008 = vpack.c.b16 %v938, %v937
      %v1009 = vpack.c.b16 %v940, %v939
      %v1010 = vpack.c.b16 %v942, %v941
      %v1011 = vpack.c.b16 %v944, %v943
      %v1012 = vpack.c.b16 %v946, %v945
      %v1013 = vpack.c.b16 %v948, %v947
      %v1014 = vpack.c.b16 %v950, %v949
      %1079 = vmatprep.subr.bf16.mxu0 0
      %1080 = vmatpush1.bf16.msra.mxu0 %v951
      %1081 = vmatprep.subr.bf16.mxu0 0
      %1082 = vmatpush1.bf16.msra.mxu0 %v952
      %1083 = vmatprep.subr.bf16.mxu0 0
      %1084 = vmatpush1.bf16.msra.mxu0 %v953
      %1085 = vmatprep.subr.bf16.mxu0 0
      %1086 = vmatpush1.bf16.msra.mxu0 %v954
      %1087 = vmatprep.subr.bf16.mxu0 0
      %1088 = vmatpush1.bf16.msra.mxu0 %v955
      %1089 = vmatprep.subr.bf16.mxu0 0
      %1090 = vmatpush1.bf16.msra.mxu0 %v956
      %1091 = vmatprep.subr.bf16.mxu0 0
      %1092 = vmatpush1.bf16.msra.mxu0 %v957
      %1093 = vmatprep.subr.bf16.mxu0 0
      %1094 = vmatpush1.bf16.msra.mxu0 %v958
      %1095 = vmatprep.subr.bf16.mxu0 0
      %1096 = vmatpush1.bf16.msra.mxu0 %v959
      %1097 = vmatprep.subr.bf16.mxu0 0
      %1098 = vmatpush1.bf16.msra.mxu0 %v960
      %1099 = vmatprep.subr.bf16.mxu0 0
      %1100 = vmatpush1.bf16.msra.mxu0 %v961
      %1101 = vmatprep.subr.bf16.mxu0 0
      %1102 = vmatpush1.bf16.msra.mxu0 %v962
      %1103 = vmatprep.subr.bf16.mxu0 0
      %1104 = vmatpush1.bf16.msra.mxu0 %v963
      %1105 = vmatprep.subr.bf16.mxu0 0
      %1106 = vmatpush1.bf16.msra.mxu0 %v964
      %1107 = vmatprep.subr.bf16.mxu0 0
      %1108 = vmatpush1.bf16.msra.mxu0 %v965
      %1109 = vmatprep.subr.bf16.mxu0 0
      %1110 = vmatpush1.bf16.msra.mxu0 %v966
      %1111 = vmatprep.mubr.bf16.mxu0 %v568
      %1112 = vmatmul.mubr.bf16.gmra.mrb[0].mxu0 %v567
      %v1113 = vpop.f32.mrb[0].mxu0
      %v1114 = vadd.f32 0.0, %v1113
      %v1115 = vpop.f32.mrb[0].mxu0
      %v1116 = vpop.f32.mrb[0].mxu0
      %v1117 = vadd.f32 0.0, %v1116
      %v1118 = vpop.f32.mrb[0].mxu0
      %1119 = vmatprep.mubr.bf16.mxu0 %v576
      %1120 = vmatmul.mubr.bf16.gmra.mrb[0].mxu0 %v575
      %v1121 = vpop.f32.mrb[0].mxu0
      %v1122 = vadd.f32 0.0, %v1121
      %v1123 = vpop.f32.mrb[0].mxu0
      %v1124 = vpop.f32.mrb[0].mxu0
      %v1125 = vadd.f32 0.0, %v1124
      %v1126 = vpop.f32.mrb[0].mxu0
      %1127 = vmatprep.mubr.bf16.mxu0 %v584
      %1128 = vmatmul.mubr.bf16.gmra.mrb[0].mxu0 %v583
      %v1129 = vpop.f32.mrb[0].mxu0
      %v1130 = vadd.f32 0.0, %v1129
      %v1131 = vpop.f32.mrb[0].mxu0
      %v1132 = vpop.f32.mrb[0].mxu0
      %v1133 = vadd.f32 0.0, %v1132
      %v1134 = vpop.f32.mrb[0].mxu0
      %1135 = vmatprep.mubr.bf16.mxu0 %v592
      %1136 = vmatmul.mubr.bf16.gmra.mrb[0].mxu0 %v591
      %v1137 = vpop.f32.mrb[0].mxu0
      %v1138 = vadd.f32 0.0, %v1137
      %v1139 = vpop.f32.mrb[0].mxu0
      %v1140 = vpop.f32.mrb[0].mxu0
      %v1141 = vadd.f32 0.0, %v1140
      %v1142 = vpop.f32.mrb[0].mxu0
      %1143 = vmatprep.mubr.bf16.mxu0 %v600
      %1144 = vmatmul.mubr.bf16.gmra.mrb[0].mxu0 %v599
      %v1145 = vpop.f32.mrb[0].mxu0
      %v1146 = vadd.f32 0.0, %v1145
      %v1147 = vpop.f32.mrb[0].mxu0
      %v1148 = vpop.f32.mrb[0].mxu0
      %v1149 = vadd.f32 0.0, %v1148
      %v1150 = vpop.f32.mrb[0].mxu0
      %1151 = vmatprep.mubr.bf16.mxu0 %v608
      %1152 = vmatmul.mubr.bf16.gmra.mrb[0].mxu0 %v607
      %v1153 = vpop.f32.mrb[0].mxu0
      %v1154 = vadd.f32 0.0, %v1153
      %v1155 = vpop.f32.mrb[0].mxu0
      %v1156 = vpop.f32.mrb[0].mxu0
      %v1157 = vadd.f32 0.0, %v1156
      %v1158 = vpop.f32.mrb[0].mxu0
      %1159 = vmatprep.mubr.bf16.mxu0 %v616
      %1160 = vmatmul.mubr.bf16.gmra.mrb[0].mxu0 %v615
      %v1161 = vpop.f32.mrb[0].mxu0
      %v1162 = vadd.f32 0.0, %v1161
      %v1163 = vpop.f32.mrb[0].mxu0
      %v1164 = vpop.f32.mrb[0].mxu0
      %v1165 = vadd.f32 0.0, %v1164
      %v1166 = vpop.f32.mrb[0].mxu0
      %1167 = vmatprep.mubr.bf16.mxu0 %v624
      %1168 = vmatmul.mubr.bf16.gmra.mrb[0].mxu0 %v623
      %v1169 = vpop.f32.mrb[0].mxu0
      %v1170 = vadd.f32 0.0, %v1169
      %v1171 = vpop.f32.mrb[0].mxu0
      %v1172 = vpop.f32.mrb[0].mxu0
      %v1173 = vpop.f32.mrb[0].mxu0
      %1174 = vdwg.mxu0
      %1175 = vmatprep.subr.bf16.mxu0 0
      %1176 = vmatpush1.bf16.msra.mxu0 %v967
      %1177 = vmatprep.subr.bf16.mxu0 0
      %1178 = vmatpush1.bf16.msra.mxu0 %v968
      %1179 = vmatprep.subr.bf16.mxu0 0
      %1180 = vmatpush1.bf16.msra.mxu0 %v969
      %1181 = vmatprep.subr.bf16.mxu0 0
      %1182 = vmatpush1.bf16.msra.mxu0 %v970
      %1183 = vmatprep.subr.bf16.mxu0 0
      %1184 = vmatpush1.bf16.msra.mxu0 %v971
      %1185 = vmatprep.subr.bf16.mxu0 0
      %1186 = vmatpush1.bf16.msra.mxu0 %v972
      %1187 = vmatprep.subr.bf16.mxu0 0
      %1188 = vmatpush1.bf16.msra.mxu0 %v973
      %1189 = vmatprep.subr.bf16.mxu0 0
      %1190 = vmatpush1.bf16.msra.mxu0 %v974
      %1191 = vmatprep.subr.bf16.mxu0 0
      %1192 = vmatpush1.bf16.msra.mxu0 %v975
      %1193 = vmatprep.subr.bf16.mxu0 0
      %1194 = vmatpush1.bf16.msra.mxu0 %v976
      %1195 = vmatprep.subr.bf16.mxu0 0
      %1196 = vmatpush1.bf16.msra.mxu0 %v977
      %1197 = vmatprep.subr.bf16.mxu0 0
      %1198 = vmatpush1.bf16.msra.mxu0 %v978
      %1199 = vmatprep.subr.bf16.mxu0 0
      %1200 = vmatpush1.bf16.msra.mxu0 %v979
      %1201 = vmatprep.subr.bf16.mxu0 0
      %1202 = vmatpush1.bf16.msra.mxu0 %v980
      %1203 = vmatprep.subr.bf16.mxu0 0
      %1204 = vmatpush1.bf16.msra.mxu0 %v981
      %1205 = vmatprep.subr.bf16.mxu0 0
      %1206 = vmatpush1.bf16.msra.mxu0 %v982
      %1207 = vmatprep.mubr.bf16.mxu0 %v570
      %1208 = vmatmul.mubr.bf16.gmra.mrb[0].mxu0 %v569
      %v1209 = vpop.f32.mrb[0].mxu0
      %v1210 = vadd.f32 %v1114, %v1209
      %v1211 = vpop.f32.mrb[0].mxu0
      %v1212 = vpop.f32.mrb[0].mxu0
      %v1213 = vadd.f32 %v1117, %v1212
      %v1214 = vpop.f32.mrb[0].mxu0
      %1215 = vmatprep.mubr.bf16.mxu0 %v578
      %1216 = vmatmul.mubr.bf16.gmra.mrb[0].mxu0 %v577
      %v1217 = vpop.f32.mrb[0].mxu0
      %v1218 = vadd.f32 %v1122, %v1217
      %v1219 = vpop.f32.mrb[0].mxu0
      %v1220 = vpop.f32.mrb[0].mxu0
      %v1221 = vadd.f32 %v1125, %v1220
      %v1222 = vpop.f32.mrb[0].mxu0
      %1223 = vmatprep.mubr.bf16.mxu0 %v586
      %1224 = vmatmul.mubr.bf16.gmra.mrb[0].mxu0 %v585
      %v1225 = vpop.f32.mrb[0].mxu0
      %v1226 = vadd.f32 %v1130, %v1225
      %v1227 = vpop.f32.mrb[0].mxu0
      %v1228 = vpop.f32.mrb[0].mxu0
      %v1229 = vadd.f32 %v1133, %v1228
      %v1230 = vpop.f32.mrb[0].mxu0
      %1231 = vmatprep.mubr.bf16.mxu0 %v594
      %1232 = vmatmul.mubr.bf16.gmra.mrb[0].mxu0 %v593
      %v1233 = vpop.f32.mrb[0].mxu0
      %v1234 = vadd.f32 %v1138, %v1233
      %v1235 = vpop.f32.mrb[0].mxu0
      %v1236 = vpop.f32.mrb[0].mxu0
      %v1237 = vadd.f32 %v1141, %v1236
      %v1238 = vpop.f32.mrb[0].mxu0
      %1239 = vmatprep.mubr.bf16.mxu0 %v602
      %1240 = vmatmul.mubr.bf16.gmra.mrb[0].mxu0 %v601
      %v1241 = vpop.f32.mrb[0].mxu0
      %v1242 = vadd.f32 %v1146, %v1241
      %v1243 = vpop.f32.mrb[0].mxu0
      %v1244 = vpop.f32.mrb[0].mxu0
      %v1245 = vadd.f32 %v1149, %v1244
      %v1246 = vpop.f32.mrb[0].mxu0
      %1247 = vmatprep.mubr.bf16.mxu0 %v610
      %1248 = vmatmul.mubr.bf16.gmra.mrb[0].mxu0 %v609
      %v1249 = vpop.f32.mrb[0].mxu0
      %v1250 = vadd.f32 %v1154, %v1249
      %v1251 = vpop.f32.mrb[0].mxu0
      %v1252 = vpop.f32.mrb[0].mxu0
      %v1253 = vadd.f32 %v1157, %v1252
      %v1254 = vpop.f32.mrb[0].mxu0
      %1255 = vmatprep.mubr.bf16.mxu0 %v618
      %1256 = vmatmul.mubr.bf16.gmra.mrb[0].mxu0 %v617
      %v1257 = vpop.f32.mrb[0].mxu0
      %v1258 = vadd.f32 %v1162, %v1257
      %v1259 = vpop.f32.mrb[0].mxu0
      %v1260 = vpop.f32.mrb[0].mxu0
      %v1261 = vadd.f32 %v1165, %v1260
      %v1262 = vpop.f32.mrb[0].mxu0
      %1263 = vmatprep.mubr.bf16.mxu0 %v626
      %1264 = vmatmul.mubr.bf16.gmra.mrb[0].mxu0 %v625
      %v1265 = vpop.f32.mrb[0].mxu0
      %v1266 = vadd.f32 %v1170, %v1265
      %v1267 = vpop.f32.mrb[0].mxu0
      %v1268 = vpop.f32.mrb[0].mxu0
      %v1269 = vpop.f32.mrb[0].mxu0
      %1270 = vdwg.mxu0
      %1271 = vmatprep.subr.bf16.mxu0 0
      %1272 = vmatpush1.bf16.msra.mxu0 %v983
      %1273 = vmatprep.subr.bf16.mxu0 0
      %1274 = vmatpush1.bf16.msra.mxu0 %v984
      %1275 = vmatprep.subr.bf16.mxu0 0
      %1276 = vmatpush1.bf16.msra.mxu0 %v985
      %1277 = vmatprep.subr.bf16.mxu0 0
      %1278 = vmatpush1.bf16.msra.mxu0 %v986
      %1279 = vmatprep.subr.bf16.mxu0 0
      %1280 = vmatpush1.bf16.msra.mxu0 %v987
      %1281 = vmatprep.subr.bf16.mxu0 0
      %1282 = vmatpush1.bf16.msra.mxu0 %v988
      %1283 = vmatprep.subr.bf16.mxu0 0
      %1284 = vmatpush1.bf16.msra.mxu0 %v989
      %1285 = vmatprep.subr.bf16.mxu0 0
      %1286 = vmatpush1.bf16.msra.mxu0 %v990
      %1287 = vmatprep.subr.bf16.mxu0 0
      %1288 = vmatpush1.bf16.msra.mxu0 %v991
      %1289 = vmatprep.subr.bf16.mxu0 0
      %1290 = vmatpush1.bf16.msra.mxu0 %v992
      %1291 = vmatprep.subr.bf16.mxu0 0
      %1292 = vmatpush1.bf16.msra.mxu0 %v993
      %1293 = vmatprep.subr.bf16.mxu0 0
      %1294 = vmatpush1.bf16.msra.mxu0 %v994
      %1295 = vmatprep.subr.bf16.mxu0 0
      %1296 = vmatpush1.bf16.msra.mxu0 %v995
      %1297 = vmatprep.subr.bf16.mxu0 0
      %1298 = vmatpush1.bf16.msra.mxu0 %v996
      %1299 = vmatprep.subr.bf16.mxu0 0
      %1300 = vmatpush1.bf16.msra.mxu0 %v997
      %1301 = vmatprep.subr.bf16.mxu0 0
      %1302 = vmatpush1.bf16.msra.mxu0 %v998
      %1303 = vmatprep.mubr.bf16.mxu0 %v572
      %1304 = vmatmul.mubr.bf16.gmra.mrb[0].mxu0 %v571
      %v1305 = vpop.f32.mrb[0].mxu0
      %v1306 = vadd.f32 %v1210, %v1305
      %v1307 = vpop.f32.mrb[0].mxu0
      %v1308 = vpop.f32.mrb[0].mxu0
      %v1309 = vadd.f32 %v1213, %v1308
      %v1310 = vpop.f32.mrb[0].mxu0
      %1311 = vmatprep.mubr.bf16.mxu0 %v580
      %1312 = vmatmul.mubr.bf16.gmra.mrb[0].mxu0 %v579
      %v1313 = vpop.f32.mrb[0].mxu0
      %v1314 = vadd.f32 %v1218, %v1313
      %v1315 = vpop.f32.mrb[0].mxu0
      %v1316 = vpop.f32.mrb[0].mxu0
      %v1317 = vadd.f32 %v1221, %v1316
      %v1318 = vpop.f32.mrb[0].mxu0
      %1319 = vmatprep.mubr.bf16.mxu0 %v588
      %1320 = vmatmul.mubr.bf16.gmra.mrb[0].mxu0 %v587
      %v1321 = vpop.f32.mrb[0].mxu0
      %v1322 = vadd.f32 %v1226, %v1321
      %v1323 = vpop.f32.mrb[0].mxu0
      %v1324 = vpop.f32.mrb[0].mxu0
      %v1325 = vadd.f32 %v1229, %v1324
      %v1326 = vpop.f32.mrb[0].mxu0
      %1327 = vmatprep.mubr.bf16.mxu0 %v596
      %1328 = vmatmul.mubr.bf16.gmra.mrb[0].mxu0 %v595
      %v1329 = vpop.f32.mrb[0].mxu0
      %v1330 = vadd.f32 %v1234, %v1329
      %v1331 = vpop.f32.mrb[0].mxu0
      %v1332 = vpop.f32.mrb[0].mxu0
      %v1333 = vadd.f32 %v1237, %v1332
      %v1334 = vpop.f32.mrb[0].mxu0
      %1335 = vmatprep.mubr.bf16.mxu0 %v604
      %1336 = vmatmul.mubr.bf16.gmra.mrb[0].mxu0 %v603
      %v1337 = vpop.f32.mrb[0].mxu0
      %v1338 = vadd.f32 %v1242, %v1337
      %v1339 = vpop.f32.mrb[0].mxu0
      %v1340 = vpop.f32.mrb[0].mxu0
      %v1341 = vadd.f32 %v1245, %v1340
      %v1342 = vpop.f32.mrb[0].mxu0
      %1343 = vmatprep.mubr.bf16.mxu0 %v612
      %1344 = vmatmul.mubr.bf16.gmra.mrb[0].mxu0 %v611
      %v1345 = vpop.f32.mrb[0].mxu0
      %v1346 = vadd.f32 %v1250, %v1345
      %v1347 = vpop.f32.mrb[0].mxu0
      %v1348 = vpop.f32.mrb[0].mxu0
      %v1349 = vadd.f32 %v1253, %v1348
      %v1350 = vpop.f32.mrb[0].mxu0
      %1351 = vmatprep.mubr.bf16.mxu0 %v620
      %1352 = vmatmul.mubr.bf16.gmra.mrb[0].mxu0 %v619
      %v1353 = vpop.f32.mrb[0].mxu0
      %v1354 = vadd.f32 %v1258, %v1353
      %v1355 = vpop.f32.mrb[0].mxu0
      %v1356 = vpop.f32.mrb[0].mxu0
      %v1357 = vadd.f32 %v1261, %v1356
      %v1358 = vpop.f32.mrb[0].mxu0
      %1359 = vmatprep.mubr.bf16.mxu0 %v628
      %1360 = vmatmul.mubr.bf16.gmra.mrb[0].mxu0 %v627
      %v1361 = vpop.f32.mrb[0].mxu0
      %v1362 = vadd.f32 %v1266, %v1361
      %v1363 = vpop.f32.mrb[0].mxu0
      %v1364 = vpop.f32.mrb[0].mxu0
      %v1365 = vpop.f32.mrb[0].mxu0
      %1366 = vdwg.mxu0
      %1367 = vmatprep.subr.bf16.mxu0 0
      %1368 = vmatpush1.bf16.msra.mxu0 %v999
      %1369 = vmatprep.subr.bf16.mxu0 0
      %1370 = vmatpush1.bf16.msra.mxu0 %v1000
      %1371 = vmatprep.subr.bf16.mxu0 0
      %1372 = vmatpush1.bf16.msra.mxu0 %v1001
      %1373 = vmatprep.subr.bf16.mxu0 0
      %1374 = vmatpush1.bf16.msra.mxu0 %v1002
      %1375 = vmatprep.subr.bf16.mxu0 0
      %1376 = vmatpush1.bf16.msra.mxu0 %v1003
      %1377 = vmatprep.subr.bf16.mxu0 0
      %1378 = vmatpush1.bf16.msra.mxu0 %v1004
      %1379 = vmatprep.subr.bf16.mxu0 0
      %1380 = vmatpush1.bf16.msra.mxu0 %v1005
      %1381 = vmatprep.subr.bf16.mxu0 0
      %1382 = vmatpush1.bf16.msra.mxu0 %v1006
      %1383 = vmatprep.subr.bf16.mxu0 0
      %1384 = vmatpush1.bf16.msra.mxu0 %v1007
      %1385 = vmatprep.subr.bf16.mxu0 0
      %1386 = vmatpush1.bf16.msra.mxu0 %v1008
      %1387 = vmatprep.subr.bf16.mxu0 0
      %1388 = vmatpush1.bf16.msra.mxu0 %v1009
      %1389 = vmatprep.subr.bf16.mxu0 0
      %1390 = vmatpush1.bf16.msra.mxu0 %v1010
      %1391 = vmatprep.subr.bf16.mxu0 0
      %1392 = vmatpush1.bf16.msra.mxu0 %v1011
      %1393 = vmatprep.subr.bf16.mxu0 0
      %1394 = vmatpush1.bf16.msra.mxu0 %v1012
      %1395 = vmatprep.subr.bf16.mxu0 0
      %1396 = vmatpush1.bf16.msra.mxu0 %v1013
      %1397 = vmatprep.subr.bf16.mxu0 0
      %1398 = vmatpush1.bf16.msra.mxu0 %v1014
      %1399 = vmatprep.mubr.bf16.mxu0 %v574
      %1400 = vmatmul.mubr.bf16.gmra.mrb[0].mxu0 %v573
      %v1401 = vpop.f32.mrb[0].mxu0
      %v1402 = vadd.f32 %v1306, %v1401
      %v1403 = vpop.f32.mrb[0].mxu0
      %v1404 = vpop.f32.mrb[0].mxu0
      %v1405 = vadd.f32 %v1309, %v1404
      %v1406 = vpop.f32.mrb[0].mxu0
      %1407 = vmatprep.mubr.bf16.mxu0 %v582
      %1408 = vmatmul.mubr.bf16.gmra.mrb[0].mxu0 %v581
      %v1409 = vpop.f32.mrb[0].mxu0
      %v1410 = vadd.f32 %v1314, %v1409
      %v1411 = vpop.f32.mrb[0].mxu0
      %v1412 = vpop.f32.mrb[0].mxu0
      %v1413 = vadd.f32 %v1317, %v1412
      %v1414 = vpop.f32.mrb[0].mxu0
      %1415 = vmatprep.mubr.bf16.mxu0 %v590
      %1416 = vmatmul.mubr.bf16.gmra.mrb[0].mxu0 %v589
      %v1417 = vpop.f32.mrb[0].mxu0
      %v1418 = vadd.f32 %v1322, %v1417
      %v1419 = vpop.f32.mrb[0].mxu0
      %v1420 = vpop.f32.mrb[0].mxu0
      %v1421 = vadd.f32 %v1325, %v1420
      %v1422 = vpop.f32.mrb[0].mxu0
      %1423 = vmatprep.mubr.bf16.mxu0 %v598
      %1424 = vmatmul.mubr.bf16.gmra.mrb[0].mxu0 %v597
      %v1425 = vpop.f32.mrb[0].mxu0
      %v1426 = vadd.f32 %v1330, %v1425
      %v1427 = vpop.f32.mrb[0].mxu0
      %v1428 = vpop.f32.mrb[0].mxu0
      %v1429 = vadd.f32 %v1333, %v1428
      %v1430 = vpop.f32.mrb[0].mxu0
      %1431 = vmatprep.mubr.bf16.mxu0 %v606
      %1432 = vmatmul.mubr.bf16.gmra.mrb[0].mxu0 %v605
      %v1433 = vpop.f32.mrb[0].mxu0
      %v1434 = vadd.f32 %v1338, %v1433
      %v1435 = vpop.f32.mrb[0].mxu0
      %v1436 = vpop.f32.mrb[0].mxu0
      %v1437 = vadd.f32 %v1341, %v1436
      %v1438 = vpop.f32.mrb[0].mxu0
      %1439 = vmatprep.mubr.bf16.mxu0 %v614
      %1440 = vmatmul.mubr.bf16.gmra.mrb[0].mxu0 %v613
      %v1441 = vpop.f32.mrb[0].mxu0
      %v1442 = vadd.f32 %v1346, %v1441
      %v1443 = vpop.f32.mrb[0].mxu0
      %v1444 = vpop.f32.mrb[0].mxu0
      %v1445 = vadd.f32 %v1349, %v1444
      %v1446 = vpop.f32.mrb[0].mxu0
      %1447 = vmatprep.mubr.bf16.mxu0 %v622
      %1448 = vmatmul.mubr.bf16.gmra.mrb[0].mxu0 %v621
      %v1449 = vpop.f32.mrb[0].mxu0
      %v1450 = vadd.f32 %v1354, %v1449
      %v1451 = vpop.f32.mrb[0].mxu0
      %v1452 = vpop.f32.mrb[0].mxu0
      %v1453 = vadd.f32 %v1357, %v1452
      %v1454 = vpop.f32.mrb[0].mxu0
      %1455 = vmatprep.mubr.bf16.mxu0 %v630
      %1456 = vmatmul.mubr.bf16.gmra.mrb[0].mxu0 %v629
      %v1457 = vpop.f32.mrb[0].mxu0
      %v1458 = vadd.f32 %v1362, %v1457
      %v1459 = vpop.f32.mrb[0].mxu0
      %v1460 = vpop.f32.mrb[0].mxu0
      %v1461 = vpop.f32.mrb[0].mxu0
      %1462 = vdwg.mxu0
      %1463 = vrot.lane.b32.xlu0 %v1402, 64
      %v1464 = vpop.permute.xlu0 %1463
      %1465 = vrot.lane.b32.xlu0 %v1405, 64
      %v1466 = vpop.permute.xlu0 %1465
      %1467 = vrot.lane.b32.xlu0 %v1410, 64
      %v1468 = vpop.permute.xlu0 %1467
      %1469 = vrot.lane.b32.xlu0 %v1413, 64
      %v1470 = vpop.permute.xlu0 %1469
      %1471 = vrot.lane.b32.xlu0 %v1418, 64
      %v1472 = vpop.permute.xlu0 %1471
      %1473 = vrot.lane.b32.xlu0 %v1421, 64
      %v1474 = vpop.permute.xlu0 %1473
      %1475 = vrot.lane.b32.xlu0 %v1426, 64
      %v1476 = vpop.permute.xlu0 %1475
      %1477 = vrot.lane.b32.xlu0 %v1429, 64
      %v1478 = vpop.permute.xlu0 %1477
      %1479 = vrot.lane.b32.xlu0 %v1434, 64
      %v1480 = vpop.permute.xlu0 %1479
      %1481 = vrot.lane.b32.xlu0 %v1437, 64
      %v1482 = vpop.permute.xlu0 %1481
      %1483 = vrot.lane.b32.xlu0 %v1442, 64
      %v1484 = vpop.permute.xlu0 %1483
      %1485 = vrot.lane.b32.xlu0 %v1445, 64
      %v1486 = vpop.permute.xlu0 %1485
      %1487 = vrot.lane.b32.xlu0 %v1450, 64
      %v1488 = vpop.permute.xlu0 %1487
      %1489 = vrot.lane.b32.xlu0 %v1453, 64
      %v1490 = vpop.permute.xlu0 %1489
      %1491 = vrot.lane.b32.xlu0 %v1458, 64
      %v1492 = vpop.permute.xlu0 %1491
      %v1493 = vmul.f32 %v1402, %v1402
      %v1494 = vmul.f32 %v1405, %v1405
      %v1495 = vmul.f32 %v1410, %v1410
      %v1496 = vmul.f32 %v1413, %v1413
      %v1497 = vmul.f32 %v1418, %v1418
      %v1498 = vmul.f32 %v1421, %v1421
      %v1499 = vmul.f32 %v1426, %v1426
      %v1500 = vmul.f32 %v1429, %v1429
      %v1501 = vmul.f32 %v1434, %v1434
      %v1502 = vmul.f32 %v1437, %v1437
      %v1503 = vmul.f32 %v1442, %v1442
      %v1504 = vmul.f32 %v1445, %v1445
      %v1505 = vmul.f32 %v1450, %v1450
      %v1506 = vmul.f32 %v1453, %v1453
      %v1507 = vmul.f32 %v1458, %v1458
      %v1508 = vmul.f32 %v1464, %v1464
      %v1509 = vmul.f32 %v1466, %v1466
      %v1510 = vmul.f32 %v1468, %v1468
      %v1511 = vmul.f32 %v1470, %v1470
      %v1512 = vmul.f32 %v1472, %v1472
      %v1513 = vmul.f32 %v1474, %v1474
      %v1514 = vmul.f32 %v1476, %v1476
      %v1515 = vmul.f32 %v1478, %v1478
      %v1516 = vmul.f32 %v1480, %v1480
      %v1517 = vmul.f32 %v1482, %v1482
      %v1518 = vmul.f32 %v1484, %v1484
      %v1519 = vmul.f32 %v1486, %v1486
      %v1520 = vmul.f32 %v1488, %v1488
      %v1521 = vmul.f32 %v1490, %v1490
      %v1522 = vmul.f32 %v1492, %v1492
      %v1523 = vadd.f32 %v1493, %v1508
      %v1524 = vadd.f32 %v1494, %v1509
      %v1525 = vadd.f32 %v1495, %v1510
      %v1526 = vadd.f32 %v1496, %v1511
      %v1527 = vadd.f32 %v1497, %v1512
      %v1528 = vadd.f32 %v1498, %v1513
      %v1529 = vadd.f32 %v1499, %v1514
      %v1530 = vadd.f32 %v1500, %v1515
      %v1531 = vadd.f32 %v1501, %v1516
      %v1532 = vadd.f32 %v1502, %v1517
      %v1533 = vadd.f32 %v1503, %v1518
      %v1534 = vadd.f32 %v1504, %v1519
      %v1535 = vadd.f32 %v1505, %v1520
      %v1536 = vadd.f32 %v1506, %v1521
      %v1537 = vadd.f32 %v1507, %v1522
      %v1538 = vrsqrt.pop %v1523
      %v1539 = vmul.f32 %v1523, %v1538
      %vm1540 = vcmp.eq.f32.partialorder %v1523, inf
      %v1541 = vsel %vm1540, %v1523, %v1539
      %vm1542 = vcmp.eq.f32.partialorder %v1523, 0.0
      %v1543 = vand.u32 %v1523, 2147483648
      %v1544 = vsel %vm1542, %v1543, %v1541
      %v1545 = vrsqrt.pop %v1524
      %v1546 = vmul.f32 %v1524, %v1545
      %vm1547 = vcmp.eq.f32.partialorder %v1524, inf
      %v1548 = vsel %vm1547, %v1524, %v1546
      %vm1549 = vcmp.eq.f32.partialorder %v1524, 0.0
      %v1550 = vand.u32 %v1524, 2147483648
      %v1551 = vsel %vm1549, %v1550, %v1548
      %v1552 = vrsqrt.pop %v1525
      %v1553 = vmul.f32 %v1525, %v1552
      %vm1554 = vcmp.eq.f32.partialorder %v1525, inf
      %v1555 = vsel %vm1554, %v1525, %v1553
      %vm1556 = vcmp.eq.f32.partialorder %v1525, 0.0
      %v1557 = vand.u32 %v1525, 2147483648
      %v1558 = vsel %vm1556, %v1557, %v1555
      %v1559 = vrsqrt.pop %v1526
      %v1560 = vmul.f32 %v1526, %v1559
      %vm1561 = vcmp.eq.f32.partialorder %v1526, inf
      %v1562 = vsel %vm1561, %v1526, %v1560
      %vm1563 = vcmp.eq.f32.partialorder %v1526, 0.0
      %v1564 = vand.u32 %v1526, 2147483648
      %v1565 = vsel %vm1563, %v1564, %v1562
      %v1566 = vrsqrt.pop %v1527
      %v1567 = vmul.f32 %v1527, %v1566
      %vm1568 = vcmp.eq.f32.partialorder %v1527, inf
      %v1569 = vsel %vm1568, %v1527, %v1567
      %vm1570 = vcmp.eq.f32.partialorder %v1527, 0.0
      %v1571 = vand.u32 %v1527, 2147483648
      %v1572 = vsel %vm1570, %v1571, %v1569
      %v1573 = vrsqrt.pop %v1528
      %v1574 = vmul.f32 %v1528, %v1573
      %vm1575 = vcmp.eq.f32.partialorder %v1528, inf
      %v1576 = vsel %vm1575, %v1528, %v1574
      %vm1577 = vcmp.eq.f32.partialorder %v1528, 0.0
      %v1578 = vand.u32 %v1528, 2147483648
      %v1579 = vsel %vm1577, %v1578, %v1576
      %v1580 = vrsqrt.pop %v1529
      %v1581 = vmul.f32 %v1529, %v1580
      %vm1582 = vcmp.eq.f32.partialorder %v1529, inf
      %v1583 = vsel %vm1582, %v1529, %v1581
      %vm1584 = vcmp.eq.f32.partialorder %v1529, 0.0
      %v1585 = vand.u32 %v1529, 2147483648
      %v1586 = vsel %vm1584, %v1585, %v1583
      %v1587 = vrsqrt.pop %v1530
      %v1588 = vmul.f32 %v1530, %v1587
      %vm1589 = vcmp.eq.f32.partialorder %v1530, inf
      %v1590 = vsel %vm1589, %v1530, %v1588
      %vm1591 = vcmp.eq.f32.partialorder %v1530, 0.0
      %v1592 = vand.u32 %v1530, 2147483648
      %v1593 = vsel %vm1591, %v1592, %v1590
      %v1594 = vrsqrt.pop %v1531
      %v1595 = vmul.f32 %v1531, %v1594
      %vm1596 = vcmp.eq.f32.partialorder %v1531, inf
      %v1597 = vsel %vm1596, %v1531, %v1595
      %vm1598 = vcmp.eq.f32.partialorder %v1531, 0.0
      %v1599 = vand.u32 %v1531, 2147483648
      %v1600 = vsel %vm1598, %v1599, %v1597
      %v1601 = vrsqrt.pop %v1532
      %v1602 = vmul.f32 %v1532, %v1601
      %vm1603 = vcmp.eq.f32.partialorder %v1532, inf
      %v1604 = vsel %vm1603, %v1532, %v1602
      %vm1605 = vcmp.eq.f32.partialorder %v1532, 0.0
      %v1606 = vand.u32 %v1532, 2147483648
      %v1607 = vsel %vm1605, %v1606, %v1604
      %v1608 = vrsqrt.pop %v1533
      %v1609 = vmul.f32 %v1533, %v1608
      %vm1610 = vcmp.eq.f32.partialorder %v1533, inf
      %v1611 = vsel %vm1610, %v1533, %v1609
      %vm1612 = vcmp.eq.f32.partialorder %v1533, 0.0
      %v1613 = vand.u32 %v1533, 2147483648
      %v1614 = vsel %vm1612, %v1613, %v1611
      %v1615 = vrsqrt.pop %v1534
      %v1616 = vmul.f32 %v1534, %v1615
      %vm1617 = vcmp.eq.f32.partialorder %v1534, inf
      %v1618 = vsel %vm1617, %v1534, %v1616
      %vm1619 = vcmp.eq.f32.partialorder %v1534, 0.0
      %v1620 = vand.u32 %v1534, 2147483648
      %v1621 = vsel %vm1619, %v1620, %v1618
      %v1622 = vrsqrt.pop %v1535
      %v1623 = vmul.f32 %v1535, %v1622
      %vm1624 = vcmp.eq.f32.partialorder %v1535, inf
      %v1625 = vsel %vm1624, %v1535, %v1623
      %vm1626 = vcmp.eq.f32.partialorder %v1535, 0.0
      %v1627 = vand.u32 %v1535, 2147483648
      %v1628 = vsel %vm1626, %v1627, %v1625
      %v1629 = vrsqrt.pop %v1536
      %v1630 = vmul.f32 %v1536, %v1629
      %vm1631 = vcmp.eq.f32.partialorder %v1536, inf
      %v1632 = vsel %vm1631, %v1536, %v1630
      %vm1633 = vcmp.eq.f32.partialorder %v1536, 0.0
      %v1634 = vand.u32 %v1536, 2147483648
      %v1635 = vsel %vm1633, %v1634, %v1632
      %v1636 = vrsqrt.pop %v1537
      %v1637 = vmul.f32 %v1537, %v1636
      %vm1638 = vcmp.eq.f32.partialorder %v1537, inf
      %v1639 = vsel %vm1638, %v1537, %v1637
      %vm1640 = vcmp.eq.f32.partialorder %v1537, 0.0
      %v1641 = vand.u32 %v1537, 2147483648
      %v1642 = vsel %vm1640, %v1641, %v1639
      %v1643 = vld [vmem:[%s2] sm:$0xff]
      %v1644 = vld [vmem:[%s2 + $0x8] sm:$0xff]
      %v1645 = vld [vmem:[%s2 + $0x10] sm:$0xff]
      %v1646 = vld [vmem:[%s2 + $0x18] sm:$0xff]
      %v1647 = vld [vmem:[%s2 + $0x20] sm:$0xff]
      %v1648 = vld [vmem:[%s2 + $0x28] sm:$0xff]
      %v1649 = vld [vmem:[%s2 + $0x30] sm:$0xff]
      %v1650 = vld [vmem:[%s2 + $0x38] sm:$0xff]
      %v1651 = vld [vmem:[%s3] sm:$0xff]
      %v1652 = vld [vmem:[%s3 + $0x8] sm:$0xff]
      %v1653 = vld [vmem:[%s3 + $0x10] sm:$0xff]
      %v1654 = vld [vmem:[%s3 + $0x18] sm:$0xff]
      %v1655 = vld [vmem:[%s3 + $0x20] sm:$0xff]
      %1656 = vmatprep.subr.mxu0 0.0
      %1657 = vmatpush1.xpose.msra.mxu0 %v1544
      %1658 = vmatprep.subr.mxu0 0.0
      %1659 = vmatpush1.xpose.msra.mxu0 %v1551
      %1660 = vmatprep.subr.mxu0 0.0
      %1661 = vmatpush1.xpose.msra.mxu0 %v1558
      %1662 = vmatprep.subr.mxu0 0.0
      %1663 = vmatpush1.xpose.msra.mxu0 %v1565
      %1664 = vmatprep.subr.mxu0 0.0
      %1665 = vmatpush1.xpose.msra.mxu0 %v1572
      %1666 = vmatprep.subr.mxu0 0.0
      %1667 = vmatpush1.xpose.msra.mxu0 0.0
      %1668 = vmatprep.subr.mxu0 0.0
      %1669 = vmatpush1.xpose.msra.mxu0 0.0
      %1670 = vmatprep.subr.mxu0 0.0
      %1671 = vmatpush1.xpose.msra.mxu0 0.0
      %1672 = vmatprep.subr.mxu0 0.0
      %1673 = vmatpush1.xpose.msra.mxu0 0.0
      %1674 = vmatprep.subr.mxu0 0.0
      %1675 = vmatpush1.xpose.msra.mxu0 0.0
      %1676 = vmatprep.subr.mxu0 0.0
      %1677 = vmatpush1.xpose.msra.mxu0 0.0
      %1678 = vmatprep.subr.mxu0 0.0
      %1679 = vmatpush1.xpose.msra.mxu0 0.0
      %1680 = vmatprep.subr.mxu0 0.0
      %1681 = vmatpush1.xpose.msra.mxu0 0.0
      %1682 = vmatprep.subr.mxu0 0.0
      %1683 = vmatpush1.xpose.msra.mxu0 0.0
      %1684 = vmatprep.subr.mxu0 0.0
      %1685 = vmatpush1.xpose.msra.mxu0 0.0
      %1686 = vmatprep.subr.mxu0 0.0
      %1687 = vmatpush1.xpose.msra.mxu0 0.0
      %1688 = vmatprep.subr.mxu0 0.0
      %1689 = vmatpush1.xpose.msra.mxu0 0.0
      %1690 = vmatprep.subr.mxu0 0.0
      %1691 = vmatpush1.xpose.msra.mxu0 0.0
      %1692 = vmatprep.subr.mxu0 0.0
      %1693 = vmatpush1.xpose.msra.mxu0 0.0
      %1694 = vmatprep.subr.mxu0 0.0
      %1695 = vmatpush1.xpose.msra.mxu0 0.0
      %1696 = vmatprep.subr.mxu0 0.0
      %1697 = vmatpush1.xpose.msra.mxu0 0.0
      %1698 = vmatprep.subr.mxu0 0.0
      %1699 = vmatpush1.xpose.msra.mxu0 0.0
      %1700 = vmatprep.subr.mxu0 0.0
      %1701 = vmatpush1.xpose.msra.mxu0 0.0
      %1702 = vmatprep.subr.mxu0 0.0
      %1703 = vmatpush1.xpose.msra.mxu0 0.0
      %1704 = vmatprep.subr.mxu0 0.0
      %1705 = vmatpush1.xpose.msra.mxu0 0.0
      %1706 = vmatprep.subr.mxu0 0.0
      %1707 = vmatpush1.xpose.msra.mxu0 0.0
      %1708 = vmatprep.subr.mxu0 0.0
      %1709 = vmatpush1.xpose.msra.mxu0 0.0
      %1710 = vmatprep.subr.mxu0 0.0
      %1711 = vmatpush1.xpose.msra.mxu0 0.0
      %1712 = vmatprep.subr.mxu0 0.0
      %1713 = vmatpush1.xpose.msra.mxu0 0.0
      %1714 = vmatprep.subr.mxu0 0.0
      %1715 = vmatpush1.xpose.msra.mxu0 0.0
      %1716 = vmatprep.subr.mxu0 0.0
      %1717 = vmatpush1.xpose.msra.mxu0 0.0
      %1718 = vmatprep.subr.mxu0 0.0
      %1719 = vmatpush1.xpose.msra.mxu0 0.0
      %1720 = vmatprep.mubr.f32.mxu0 0.0
      %1721 = vmatmul.mubr.f32.gmra.mrb[0].mxu0 %v1643
      %v1722 = vpop.f32.mrb[0].mxu0
      %v1723 = vadd.f32 0.0, %v1722
      %v1724 = vpop.f32.mrb[0].mxu0
      %1725 = vmatprep.mubr.f32.mxu0 0.0
      %1726 = vmatmul.mubr.f32.gmra.mrb[0].mxu0 %v1644
      %v1727 = vpop.f32.mrb[0].mxu0
      %v1728 = vadd.f32 0.0, %v1727
      %v1729 = vpop.f32.mrb[0].mxu0
      %1730 = vmatprep.mubr.f32.mxu0 0.0
      %1731 = vmatmul.mubr.f32.gmra.mrb[0].mxu0 %v1645
      %v1732 = vpop.f32.mrb[0].mxu0
      %v1733 = vadd.f32 0.0, %v1732
      %v1734 = vpop.f32.mrb[0].mxu0
      %1735 = vmatprep.mubr.f32.mxu0 0.0
      %1736 = vmatmul.mubr.f32.gmra.mrb[0].mxu0 %v1646
      %v1737 = vpop.f32.mrb[0].mxu0
      %v1738 = vadd.f32 0.0, %v1737
      %v1739 = vpop.f32.mrb[0].mxu0
      %1740 = vmatprep.mubr.f32.mxu0 0.0
      %1741 = vmatmul.mubr.f32.gmra.mrb[0].mxu0 %v1647
      %v1742 = vpop.f32.mrb[0].mxu0
      %v1743 = vadd.f32 0.0, %v1742
      %v1744 = vpop.f32.mrb[0].mxu0
      %1745 = vmatprep.mubr.f32.mxu0 0.0
      %1746 = vmatmul.mubr.f32.gmra.mrb[0].mxu0 %v1648
      %v1747 = vpop.f32.mrb[0].mxu0
      %v1748 = vadd.f32 0.0, %v1747
      %v1749 = vpop.f32.mrb[0].mxu0
      %1750 = vmatprep.mubr.f32.mxu0 0.0
      %1751 = vmatmul.mubr.f32.gmra.mrb[0].mxu0 %v1649
      %v1752 = vpop.f32.mrb[0].mxu0
      %v1753 = vadd.f32 0.0, %v1752
      %v1754 = vpop.f32.mrb[0].mxu0
      %1755 = vmatprep.mubr.f32.mxu0 0.0
      %1756 = vmatmul.mubr.f32.gmra.mrb[0].mxu0 %v1650
      %v1757 = vpop.f32.mrb[0].mxu0
      %v1758 = vadd.f32 0.0, %v1757
      %v1759 = vpop.f32.mrb[0].mxu0
      %1760 = vdwg.mxu0
      %vm1761 = vcmask 326656
      %v1763 = vsel %vm1761, %v1723, 0
      %v1766 = vsel %vm1761, %v1728, 0
      %v1769 = vsel %vm1761, %v1733, 0
      %v1772 = vsel %vm1761, %v1738, 0
      %v1775 = vsel %vm1761, %v1743, 0
      %v1778 = vsel %vm1761, %v1748, 0
      %v1781 = vsel %vm1761, %v1753, 0
      %v1784 = vsel %vm1761, %v1758, 0
      %1786 = vmatprep.subr.mxu0 0.0
      %1787 = vmatpush1.msra.mxu0 %v1651
      %1788 = vmatprep.subr.mxu0 0.0
      %1789 = vmatpush1.msra.mxu0 %v1652
      %1790 = vmatprep.subr.mxu0 0.0
      %1791 = vmatpush1.msra.mxu0 %v1653
      %1792 = vmatprep.subr.mxu0 0.0
      %1793 = vmatpush1.msra.mxu0 %v1654
      %1794 = vmatprep.subr.mxu0 0.0
      %1795 = vmatpush1.msra.mxu0 %v1655
      %1796 = vmatprep.subr.mxu0 0.0
      %1797 = vmatpush1.msra.mxu0 0.0
      %1798 = vmatprep.subr.mxu0 0.0
      %1799 = vmatpush1.msra.mxu0 0.0
      %1800 = vmatprep.subr.mxu0 0.0
      %1801 = vmatpush1.msra.mxu0 0.0
      %1802 = vmatprep.subr.mxu0 0.0
      %1803 = vmatpush1.msra.mxu0 0.0
      %1804 = vmatprep.subr.mxu0 0.0
      %1805 = vmatpush1.msra.mxu0 0.0
      %1806 = vmatprep.subr.mxu0 0.0
      %1807 = vmatpush1.msra.mxu0 0.0
      %1808 = vmatprep.subr.mxu0 0.0
      %1809 = vmatpush1.msra.mxu0 0.0
      %1810 = vmatprep.subr.mxu0 0.0
      %1811 = vmatpush1.msra.mxu0 0.0
      %1812 = vmatprep.subr.mxu0 0.0
      %1813 = vmatpush1.msra.mxu0 0.0
      %1814 = vmatprep.subr.mxu0 0.0
      %1815 = vmatpush1.msra.mxu0 0.0
      %1816 = vmatprep.subr.mxu0 0.0
      %1817 = vmatpush1.msra.mxu0 0.0
      %1818 = vmatprep.subr.mxu0 0.0
      %1819 = vmatpush1.msra.mxu0 0.0
      %1820 = vmatprep.subr.mxu0 0.0
      %1821 = vmatpush1.msra.mxu0 0.0
      %1822 = vmatprep.subr.mxu0 0.0
      %1823 = vmatpush1.msra.mxu0 0.0
      %1824 = vmatprep.subr.mxu0 0.0
      %1825 = vmatpush1.msra.mxu0 0.0
      %1826 = vmatprep.subr.mxu0 0.0
      %1827 = vmatpush1.msra.mxu0 0.0
      %1828 = vmatprep.subr.mxu0 0.0
      %1829 = vmatpush1.msra.mxu0 0.0
      %1830 = vmatprep.subr.mxu0 0.0
      %1831 = vmatpush1.msra.mxu0 0.0
      %1832 = vmatprep.subr.mxu0 0.0
      %1833 = vmatpush1.msra.mxu0 0.0
      %1834 = vmatprep.subr.mxu0 0.0
      %1835 = vmatpush1.msra.mxu0 0.0
      %1836 = vmatprep.subr.mxu0 0.0
      %1837 = vmatpush1.msra.mxu0 0.0
      %1838 = vmatprep.subr.mxu0 0.0
      %1839 = vmatpush1.msra.mxu0 0.0
      %1840 = vmatprep.subr.mxu0 0.0
      %1841 = vmatpush1.msra.mxu0 0.0
      %1842 = vmatprep.subr.mxu0 0.0
      %1843 = vmatpush1.msra.mxu0 0.0
      %1844 = vmatprep.subr.mxu0 0.0
      %1845 = vmatpush1.msra.mxu0 0.0
      %1846 = vmatprep.subr.mxu0 0.0
      %1847 = vmatpush1.msra.mxu0 0.0
      %1848 = vmatprep.subr.mxu0 0.0
      %1849 = vmatpush1.msra.mxu0 0.0
      %1850 = vmatprep.mubr.f32.mxu0 0.0
      %1851 = vmatmul.mubr.f32.gmra.mrb[0].mxu0 %v1763
      %v1852 = vpop.f32.mrb[0].mxu0
      %v1853 = vadd.f32 0.0, %v1852
      %v1854 = vpop.f32.mrb[0].mxu0
      %1855 = vmatprep.mubr.f32.mxu0 0.0
      %1856 = vmatmul.mubr.f32.gmra.mrb[0].mxu0 %v1766
      %v1857 = vpop.f32.mrb[0].mxu0
      %v1858 = vadd.f32 0.0, %v1857
      %v1859 = vpop.f32.mrb[0].mxu0
      %1860 = vmatprep.mubr.f32.mxu0 0.0
      %1861 = vmatmul.mubr.f32.gmra.mrb[0].mxu0 %v1769
      %v1862 = vpop.f32.mrb[0].mxu0
      %v1863 = vadd.f32 0.0, %v1862
      %v1864 = vpop.f32.mrb[0].mxu0
      %1865 = vmatprep.mubr.f32.mxu0 0.0
      %1866 = vmatmul.mubr.f32.gmra.mrb[0].mxu0 %v1772
      %v1867 = vpop.f32.mrb[0].mxu0
      %v1868 = vadd.f32 0.0, %v1867
      %v1869 = vpop.f32.mrb[0].mxu0
      %1870 = vmatprep.mubr.f32.mxu0 0.0
      %1871 = vmatmul.mubr.f32.gmra.mrb[0].mxu0 %v1775
      %v1872 = vpop.f32.mrb[0].mxu0
      %v1873 = vadd.f32 0.0, %v1872
      %v1874 = vpop.f32.mrb[0].mxu0
      %1875 = vmatprep.mubr.f32.mxu0 0.0
      %1876 = vmatmul.mubr.f32.gmra.mrb[0].mxu0 %v1778
      %v1877 = vpop.f32.mrb[0].mxu0
      %v1878 = vadd.f32 0.0, %v1877
      %v1879 = vpop.f32.mrb[0].mxu0
      %1880 = vmatprep.mubr.f32.mxu0 0.0
      %1881 = vmatmul.mubr.f32.gmra.mrb[0].mxu0 %v1781
      %v1882 = vpop.f32.mrb[0].mxu0
      %v1883 = vadd.f32 0.0, %v1882
      %v1884 = vpop.f32.mrb[0].mxu0
      %1885 = vmatprep.mubr.f32.mxu0 0.0
      %1886 = vmatmul.mubr.f32.gmra.mrb[0].mxu0 %v1784
      %v1887 = vpop.f32.mrb[0].mxu0
      %v1888 = vadd.f32 0.0, %v1887
      %v1889 = vpop.f32.mrb[0].mxu0
      %1890 = vdwg.mxu0
      %vm1891 = vcmask 523264
      %1892 = vst.msk [vmem:[%s197] sm:$0xff] %vm1891, %v1853
      %1893 = vst.msk [vmem:[%s197 + $0x8] sm:$0xff] %vm1891, %v1858
      %1894 = vst.msk [vmem:[%s197 + $0x10] sm:$0xff] %vm1891, %v1863
      %1895 = vst.msk [vmem:[%s197 + $0x18] sm:$0xff] %vm1891, %v1868
      %1896 = vst.msk [vmem:[%s197 + $0x20] sm:$0xff] %vm1891, %v1873
      %1897 = vst.msk [vmem:[%s197 + $0x28] sm:$0xff] %vm1891, %v1878
      %1898 = vst.msk [vmem:[%s197 + $0x30] sm:$0xff] %vm1891, %v1883
      %1899 = vst.msk [vmem:[%s197 + $0x38] sm:$0xff] %vm1891, %v1888
      %1900 = vmatprep.subr.mxu0 0.0
      %1901 = vmatpush1.xpose.msra.mxu0 %v1579
      %1902 = vmatprep.subr.mxu0 0.0
      %1903 = vmatpush1.xpose.msra.mxu0 %v1586
      %1904 = vmatprep.subr.mxu0 0.0
      %1905 = vmatpush1.xpose.msra.mxu0 %v1593
      %1906 = vmatprep.subr.mxu0 0.0
      %1907 = vmatpush1.xpose.msra.mxu0 %v1600
      %1908 = vmatprep.subr.mxu0 0.0
      %1909 = vmatpush1.xpose.msra.mxu0 %v1607
      %1910 = vmatprep.subr.mxu0 0.0
      %1911 = vmatpush1.xpose.msra.mxu0 0.0
      %1912 = vmatprep.subr.mxu0 0.0
      %1913 = vmatpush1.xpose.msra.mxu0 0.0
      %1914 = vmatprep.subr.mxu0 0.0
      %1915 = vmatpush1.xpose.msra.mxu0 0.0
      %1916 = vmatprep.subr.mxu0 0.0
      %1917 = vmatpush1.xpose.msra.mxu0 0.0
      %1918 = vmatprep.subr.mxu0 0.0
      %1919 = vmatpush1.xpose.msra.mxu0 0.0
      %1920 = vmatprep.subr.mxu0 0.0
      %1921 = vmatpush1.xpose.msra.mxu0 0.0
      %1922 = vmatprep.subr.mxu0 0.0
      %1923 = vmatpush1.xpose.msra.mxu0 0.0
      %1924 = vmatprep.subr.mxu0 0.0
      %1925 = vmatpush1.xpose.msra.mxu0 0.0
      %1926 = vmatprep.subr.mxu0 0.0
      %1927 = vmatpush1.xpose.msra.mxu0 0.0
      %1928 = vmatprep.subr.mxu0 0.0
      %1929 = vmatpush1.xpose.msra.mxu0 0.0
      %1930 = vmatprep.subr.mxu0 0.0
      %1931 = vmatpush1.xpose.msra.mxu0 0.0
      %1932 = vmatprep.subr.mxu0 0.0
      %1933 = vmatpush1.xpose.msra.mxu0 0.0
      %1934 = vmatprep.subr.mxu0 0.0
      %1935 = vmatpush1.xpose.msra.mxu0 0.0
      %1936 = vmatprep.subr.mxu0 0.0
      %1937 = vmatpush1.xpose.msra.mxu0 0.0
      %1938 = vmatprep.subr.mxu0 0.0
      %1939 = vmatpush1.xpose.msra.mxu0 0.0
      %1940 = vmatprep.subr.mxu0 0.0
      %1941 = vmatpush1.xpose.msra.mxu0 0.0
      %1942 = vmatprep.subr.mxu0 0.0
      %1943 = vmatpush1.xpose.msra.mxu0 0.0
      %1944 = vmatprep.subr.mxu0 0.0
      %1945 = vmatpush1.xpose.msra.mxu0 0.0
      %1946 = vmatprep.subr.mxu0 0.0
      %1947 = vmatpush1.xpose.msra.mxu0 0.0
      %1948 = vmatprep.subr.mxu0 0.0
      %1949 = vmatpush1.xpose.msra.mxu0 0.0
      %1950 = vmatprep.subr.mxu0 0.0
      %1951 = vmatpush1.xpose.msra.mxu0 0.0
      %1952 = vmatprep.subr.mxu0 0.0
      %1953 = vmatpush1.xpose.msra.mxu0 0.0
      %1954 = vmatprep.subr.mxu0 0.0
      %1955 = vmatpush1.xpose.msra.mxu0 0.0
      %1956 = vmatprep.subr.mxu0 0.0
      %1957 = vmatpush1.xpose.msra.mxu0 0.0
      %1958 = vmatprep.subr.mxu0 0.0
      %1959 = vmatpush1.xpose.msra.mxu0 0.0
      %1960 = vmatprep.subr.mxu0 0.0
      %1961 = vmatpush1.xpose.msra.mxu0 0.0
      %1962 = vmatprep.subr.mxu0 0.0
      %1963 = vmatpush1.xpose.msra.mxu0 0.0
      %1964 = vmatprep.mubr.f32.mxu0 0.0
      %1965 = vmatmul.mubr.f32.gmra.mrb[0].mxu0 %v1643
      %v1966 = vpop.f32.mrb[0].mxu0
      %v1967 = vadd.f32 0.0, %v1966
      %v1968 = vpop.f32.mrb[0].mxu0
      %1969 = vmatprep.mubr.f32.mxu0 0.0
      %1970 = vmatmul.mubr.f32.gmra.mrb[0].mxu0 %v1644
      %v1971 = vpop.f32.mrb[0].mxu0
      %v1972 = vadd.f32 0.0, %v1971
      %v1973 = vpop.f32.mrb[0].mxu0
      %1974 = vmatprep.mubr.f32.mxu0 0.0
      %1975 = vmatmul.mubr.f32.gmra.mrb[0].mxu0 %v1645
      %v1976 = vpop.f32.mrb[0].mxu0
      %v1977 = vadd.f32 0.0, %v1976
      %v1978 = vpop.f32.mrb[0].mxu0
      %1979 = vmatprep.mubr.f32.mxu0 0.0
      %1980 = vmatmul.mubr.f32.gmra.mrb[0].mxu0 %v1646
      %v1981 = vpop.f32.mrb[0].mxu0
      %v1982 = vadd.f32 0.0, %v1981
      %v1983 = vpop.f32.mrb[0].mxu0
      %1984 = vmatprep.mubr.f32.mxu0 0.0
      %1985 = vmatmul.mubr.f32.gmra.mrb[0].mxu0 %v1647
      %v1986 = vpop.f32.mrb[0].mxu0
      %v1987 = vadd.f32 0.0, %v1986
      %v1988 = vpop.f32.mrb[0].mxu0
      %1989 = vmatprep.mubr.f32.mxu0 0.0
      %1990 = vmatmul.mubr.f32.gmra.mrb[0].mxu0 %v1648
      %v1991 = vpop.f32.mrb[0].mxu0
      %v1992 = vadd.f32 0.0, %v1991
      %v1993 = vpop.f32.mrb[0].mxu0
      %1994 = vmatprep.mubr.f32.mxu0 0.0
      %1995 = vmatmul.mubr.f32.gmra.mrb[0].mxu0 %v1649
      %v1996 = vpop.f32.mrb[0].mxu0
      %v1997 = vadd.f32 0.0, %v1996
      %v1998 = vpop.f32.mrb[0].mxu0
      %1999 = vmatprep.mubr.f32.mxu0 0.0
      %2000 = vmatmul.mubr.f32.gmra.mrb[0].mxu0 %v1650
      %v2001 = vpop.f32.mrb[0].mxu0
      %v2002 = vadd.f32 0.0, %v2001
      %v2003 = vpop.f32.mrb[0].mxu0
      %2004 = vdwg.mxu0
      %v2006 = vsel %vm1761, %v1967, 0
      %v2009 = vsel %vm1761, %v1972, 0
      %v2012 = vsel %vm1761, %v1977, 0
      %v2015 = vsel %vm1761, %v1982, 0
      %v2018 = vsel %vm1761, %v1987, 0
      %v2021 = vsel %vm1761, %v1992, 0
      %v2024 = vsel %vm1761, %v1997, 0
      %v2027 = vsel %vm1761, %v2002, 0
      %2029 = vmatprep.subr.mxu0 0.0
      %2030 = vmatpush1.msra.mxu0 %v1651
      %2031 = vmatprep.subr.mxu0 0.0
      %2032 = vmatpush1.msra.mxu0 %v1652
      %2033 = vmatprep.subr.mxu0 0.0
      %2034 = vmatpush1.msra.mxu0 %v1653
      %2035 = vmatprep.subr.mxu0 0.0
      %2036 = vmatpush1.msra.mxu0 %v1654
      %2037 = vmatprep.subr.mxu0 0.0
      %2038 = vmatpush1.msra.mxu0 %v1655
      %2039 = vmatprep.subr.mxu0 0.0
      %2040 = vmatpush1.msra.mxu0 0.0
      %2041 = vmatprep.subr.mxu0 0.0
      %2042 = vmatpush1.msra.mxu0 0.0
      %2043 = vmatprep.subr.mxu0 0.0
      %2044 = vmatpush1.msra.mxu0 0.0
      %2045 = vmatprep.subr.mxu0 0.0
      %2046 = vmatpush1.msra.mxu0 0.0
      %2047 = vmatprep.subr.mxu0 0.0
      %2048 = vmatpush1.msra.mxu0 0.0
      %2049 = vmatprep.subr.mxu0 0.0
      %2050 = vmatpush1.msra.mxu0 0.0
      %2051 = vmatprep.subr.mxu0 0.0
      %2052 = vmatpush1.msra.mxu0 0.0
      %2053 = vmatprep.subr.mxu0 0.0
      %2054 = vmatpush1.msra.mxu0 0.0
      %2055 = vmatprep.subr.mxu0 0.0
      %2056 = vmatpush1.msra.mxu0 0.0
      %2057 = vmatprep.subr.mxu0 0.0
      %2058 = vmatpush1.msra.mxu0 0.0
      %2059 = vmatprep.subr.mxu0 0.0
      %2060 = vmatpush1.msra.mxu0 0.0
      %2061 = vmatprep.subr.mxu0 0.0
      %2062 = vmatpush1.msra.mxu0 0.0
      %2063 = vmatprep.subr.mxu0 0.0
      %2064 = vmatpush1.msra.mxu0 0.0
      %2065 = vmatprep.subr.mxu0 0.0
      %2066 = vmatpush1.msra.mxu0 0.0
      %2067 = vmatprep.subr.mxu0 0.0
      %2068 = vmatpush1.msra.mxu0 0.0
      %2069 = vmatprep.subr.mxu0 0.0
      %2070 = vmatpush1.msra.mxu0 0.0
      %2071 = vmatprep.subr.mxu0 0.0
      %2072 = vmatpush1.msra.mxu0 0.0
      %2073 = vmatprep.subr.mxu0 0.0
      %2074 = vmatpush1.msra.mxu0 0.0
      %2075 = vmatprep.subr.mxu0 0.0
      %2076 = vmatpush1.msra.mxu0 0.0
      %2077 = vmatprep.subr.mxu0 0.0
      %2078 = vmatpush1.msra.mxu0 0.0
      %2079 = vmatprep.subr.mxu0 0.0
      %2080 = vmatpush1.msra.mxu0 0.0
      %2081 = vmatprep.subr.mxu0 0.0
      %2082 = vmatpush1.msra.mxu0 0.0
      %2083 = vmatprep.subr.mxu0 0.0
      %2084 = vmatpush1.msra.mxu0 0.0
      %2085 = vmatprep.subr.mxu0 0.0
      %2086 = vmatpush1.msra.mxu0 0.0
      %2087 = vmatprep.subr.mxu0 0.0
      %2088 = vmatpush1.msra.mxu0 0.0
      %2089 = vmatprep.subr.mxu0 0.0
      %2090 = vmatpush1.msra.mxu0 0.0
      %2091 = vmatprep.subr.mxu0 0.0
      %2092 = vmatpush1.msra.mxu0 0.0
      %2093 = vmatprep.mubr.f32.mxu0 0.0
      %2094 = vmatmul.mubr.f32.gmra.mrb[0].mxu0 %v2006
      %v2095 = vpop.f32.mrb[0].mxu0
      %v2096 = vadd.f32 0.0, %v2095
      %v2097 = vpop.f32.mrb[0].mxu0
      %2098 = vmatprep.mubr.f32.mxu0 0.0
      %2099 = vmatmul.mubr.f32.gmra.mrb[0].mxu0 %v2009
      %v2100 = vpop.f32.mrb[0].mxu0
      %v2101 = vadd.f32 0.0, %v2100
      %v2102 = vpop.f32.mrb[0].mxu0
      %2103 = vmatprep.mubr.f32.mxu0 0.0
      %2104 = vmatmul.mubr.f32.gmra.mrb[0].mxu0 %v2012
      %v2105 = vpop.f32.mrb[0].mxu0
      %v2106 = vadd.f32 0.0, %v2105
      %v2107 = vpop.f32.mrb[0].mxu0
      %2108 = vmatprep.mubr.f32.mxu0 0.0
      %2109 = vmatmul.mubr.f32.gmra.mrb[0].mxu0 %v2015
      %v2110 = vpop.f32.mrb[0].mxu0
      %v2111 = vadd.f32 0.0, %v2110
      %v2112 = vpop.f32.mrb[0].mxu0
      %2113 = vmatprep.mubr.f32.mxu0 0.0
      %2114 = vmatmul.mubr.f32.gmra.mrb[0].mxu0 %v2018
      %v2115 = vpop.f32.mrb[0].mxu0
      %v2116 = vadd.f32 0.0, %v2115
      %v2117 = vpop.f32.mrb[0].mxu0
      %2118 = vmatprep.mubr.f32.mxu0 0.0
      %2119 = vmatmul.mubr.f32.gmra.mrb[0].mxu0 %v2021
      %v2120 = vpop.f32.mrb[0].mxu0
      %v2121 = vadd.f32 0.0, %v2120
      %v2122 = vpop.f32.mrb[0].mxu0
      %2123 = vmatprep.mubr.f32.mxu0 0.0
      %2124 = vmatmul.mubr.f32.gmra.mrb[0].mxu0 %v2024
      %v2125 = vpop.f32.mrb[0].mxu0
      %v2126 = vadd.f32 0.0, %v2125
      %v2127 = vpop.f32.mrb[0].mxu0
      %2128 = vmatprep.mubr.f32.mxu0 0.0
      %2129 = vmatmul.mubr.f32.gmra.mrb[0].mxu0 %v2027
      %v2130 = vpop.f32.mrb[0].mxu0
      %v2131 = vadd.f32 0.0, %v2130
      %v2132 = vpop.f32.mrb[0].mxu0
      %2133 = vdwg.mxu0
      %s2134 = scalar_lea.vmem %s197, 64
      %2135 = vst.msk [vmem:[%s2134] sm:$0xff] %vm1891, %v2096
      %2136 = vst.msk [vmem:[%s2134 + $0x8] sm:$0xff] %vm1891, %v2101
      %2137 = vst.msk [vmem:[%s2134 + $0x10] sm:$0xff] %vm1891, %v2106
      %2138 = vst.msk [vmem:[%s2134 + $0x18] sm:$0xff] %vm1891, %v2111
      %2139 = vst.msk [vmem:[%s2134 + $0x20] sm:$0xff] %vm1891, %v2116
      %2140 = vst.msk [vmem:[%s2134 + $0x28] sm:$0xff] %vm1891, %v2121
      %2141 = vst.msk [vmem:[%s2134 + $0x30] sm:$0xff] %vm1891, %v2126
      %2142 = vst.msk [vmem:[%s2134 + $0x38] sm:$0xff] %vm1891, %v2131
      %2143 = vmatprep.subr.mxu0 0.0
      %2144 = vmatpush1.xpose.msra.mxu0 %v1614
      %2145 = vmatprep.subr.mxu0 0.0
      %2146 = vmatpush1.xpose.msra.mxu0 %v1621
      %2147 = vmatprep.subr.mxu0 0.0
      %2148 = vmatpush1.xpose.msra.mxu0 %v1628
      %2149 = vmatprep.subr.mxu0 0.0
      %2150 = vmatpush1.xpose.msra.mxu0 %v1635
      %2151 = vmatprep.subr.mxu0 0.0
      %2152 = vmatpush1.xpose.msra.mxu0 %v1642
      %2153 = vmatprep.subr.mxu0 0.0
      %2154 = vmatpush1.xpose.msra.mxu0 0.0
      %2155 = vmatprep.subr.mxu0 0.0
      %2156 = vmatpush1.xpose.msra.mxu0 0.0
      %2157 = vmatprep.subr.mxu0 0.0
      %2158 = vmatpush1.xpose.msra.mxu0 0.0
      %2159 = vmatprep.subr.mxu0 0.0
      %2160 = vmatpush1.xpose.msra.mxu0 0.0
      %2161 = vmatprep.subr.mxu0 0.0
      %2162 = vmatpush1.xpose.msra.mxu0 0.0
      %2163 = vmatprep.subr.mxu0 0.0
      %2164 = vmatpush1.xpose.msra.mxu0 0.0
      %2165 = vmatprep.subr.mxu0 0.0
      %2166 = vmatpush1.xpose.msra.mxu0 0.0
      %2167 = vmatprep.subr.mxu0 0.0
      %2168 = vmatpush1.xpose.msra.mxu0 0.0
      %2169 = vmatprep.subr.mxu0 0.0
      %2170 = vmatpush1.xpose.msra.mxu0 0.0
      %2171 = vmatprep.subr.mxu0 0.0
      %2172 = vmatpush1.xpose.msra.mxu0 0.0
      %2173 = vmatprep.subr.mxu0 0.0
      %2174 = vmatpush1.xpose.msra.mxu0 0.0
      %2175 = vmatprep.subr.mxu0 0.0
      %2176 = vmatpush1.xpose.msra.mxu0 0.0
      %2177 = vmatprep.subr.mxu0 0.0
      %2178 = vmatpush1.xpose.msra.mxu0 0.0
      %2179 = vmatprep.subr.mxu0 0.0
      %2180 = vmatpush1.xpose.msra.mxu0 0.0
      %2181 = vmatprep.subr.mxu0 0.0
      %2182 = vmatpush1.xpose.msra.mxu0 0.0
      %2183 = vmatprep.subr.mxu0 0.0
      %2184 = vmatpush1.xpose.msra.mxu0 0.0
      %2185 = vmatprep.subr.mxu0 0.0
      %2186 = vmatpush1.xpose.msra.mxu0 0.0
      %2187 = vmatprep.subr.mxu0 0.0
      %2188 = vmatpush1.xpose.msra.mxu0 0.0
      %2189 = vmatprep.subr.mxu0 0.0
      %2190 = vmatpush1.xpose.msra.mxu0 0.0
      %2191 = vmatprep.subr.mxu0 0.0
      %2192 = vmatpush1.xpose.msra.mxu0 0.0
      %2193 = vmatprep.subr.mxu0 0.0
      %2194 = vmatpush1.xpose.msra.mxu0 0.0
      %2195 = vmatprep.subr.mxu0 0.0
      %2196 = vmatpush1.xpose.msra.mxu0 0.0
      %2197 = vmatprep.subr.mxu0 0.0
      %2198 = vmatpush1.xpose.msra.mxu0 0.0
      %2199 = vmatprep.subr.mxu0 0.0
      %2200 = vmatpush1.xpose.msra.mxu0 0.0
      %2201 = vmatprep.subr.mxu0 0.0
      %2202 = vmatpush1.xpose.msra.mxu0 0.0
      %2203 = vmatprep.subr.mxu0 0.0
      %2204 = vmatpush1.xpose.msra.mxu0 0.0
      %2205 = vmatprep.subr.mxu0 0.0
      %2206 = vmatpush1.xpose.msra.mxu0 0.0
      %2207 = vmatprep.mubr.f32.mxu0 0.0
      %2208 = vmatmul.mubr.f32.gmra.mrb[0].mxu0 %v1643
      %v2209 = vpop.f32.mrb[0].mxu0
      %v2210 = vadd.f32 0.0, %v2209
      %v2211 = vpop.f32.mrb[0].mxu0
      %2212 = vmatprep.mubr.f32.mxu0 0.0
      %2213 = vmatmul.mubr.f32.gmra.mrb[0].mxu0 %v1644
      %v2214 = vpop.f32.mrb[0].mxu0
      %v2215 = vadd.f32 0.0, %v2214
      %v2216 = vpop.f32.mrb[0].mxu0
      %2217 = vmatprep.mubr.f32.mxu0 0.0
      %2218 = vmatmul.mubr.f32.gmra.mrb[0].mxu0 %v1645
      %v2219 = vpop.f32.mrb[0].mxu0
      %v2220 = vadd.f32 0.0, %v2219
      %v2221 = vpop.f32.mrb[0].mxu0
      %2222 = vmatprep.mubr.f32.mxu0 0.0
      %2223 = vmatmul.mubr.f32.gmra.mrb[0].mxu0 %v1646
      %v2224 = vpop.f32.mrb[0].mxu0
      %v2225 = vadd.f32 0.0, %v2224
      %v2226 = vpop.f32.mrb[0].mxu0
      %2227 = vmatprep.mubr.f32.mxu0 0.0
      %2228 = vmatmul.mubr.f32.gmra.mrb[0].mxu0 %v1647
      %v2229 = vpop.f32.mrb[0].mxu0
      %v2230 = vadd.f32 0.0, %v2229
      %v2231 = vpop.f32.mrb[0].mxu0
      %2232 = vmatprep.mubr.f32.mxu0 0.0
      %2233 = vmatmul.mubr.f32.gmra.mrb[0].mxu0 %v1648
      %v2234 = vpop.f32.mrb[0].mxu0
      %v2235 = vadd.f32 0.0, %v2234
      %v2236 = vpop.f32.mrb[0].mxu0
      %2237 = vmatprep.mubr.f32.mxu0 0.0
      %2238 = vmatmul.mubr.f32.gmra.mrb[0].mxu0 %v1649
      %v2239 = vpop.f32.mrb[0].mxu0
      %v2240 = vadd.f32 0.0, %v2239
      %v2241 = vpop.f32.mrb[0].mxu0
      %2242 = vmatprep.mubr.f32.mxu0 0.0
      %2243 = vmatmul.mubr.f32.gmra.mrb[0].mxu0 %v1650
      %v2244 = vpop.f32.mrb[0].mxu0
      %v2245 = vadd.f32 0.0, %v2244
      %v2246 = vpop.f32.mrb[0].mxu0
      %2247 = vdwg.mxu0
      %v2249 = vsel %vm1761, %v2210, 0
      %v2252 = vsel %vm1761, %v2215, 0
      %v2255 = vsel %vm1761, %v2220, 0
      %v2258 = vsel %vm1761, %v2225, 0
      %v2261 = vsel %vm1761, %v2230, 0
      %v2264 = vsel %vm1761, %v2235, 0
      %v2267 = vsel %vm1761, %v2240, 0
      %v2270 = vsel %vm1761, %v2245, 0
      %2272 = vmatprep.subr.mxu0 0.0
      %2273 = vmatpush1.msra.mxu0 %v1651
      %2274 = vmatprep.subr.mxu0 0.0
      %2275 = vmatpush1.msra.mxu0 %v1652
      %2276 = vmatprep.subr.mxu0 0.0
      %2277 = vmatpush1.msra.mxu0 %v1653
      %2278 = vmatprep.subr.mxu0 0.0
      %2279 = vmatpush1.msra.mxu0 %v1654
      %2280 = vmatprep.subr.mxu0 0.0
      %2281 = vmatpush1.msra.mxu0 %v1655
      %2282 = vmatprep.subr.mxu0 0.0
      %2283 = vmatpush1.msra.mxu0 0.0
      %2284 = vmatprep.subr.mxu0 0.0
      %2285 = vmatpush1.msra.mxu0 0.0
      %2286 = vmatprep.subr.mxu0 0.0
      %2287 = vmatpush1.msra.mxu0 0.0
      %2288 = vmatprep.subr.mxu0 0.0
      %2289 = vmatpush1.msra.mxu0 0.0
      %2290 = vmatprep.subr.mxu0 0.0
      %2291 = vmatpush1.msra.mxu0 0.0
      %2292 = vmatprep.subr.mxu0 0.0
      %2293 = vmatpush1.msra.mxu0 0.0
      %2294 = vmatprep.subr.mxu0 0.0
      %2295 = vmatpush1.msra.mxu0 0.0
      %2296 = vmatprep.subr.mxu0 0.0
      %2297 = vmatpush1.msra.mxu0 0.0
      %2298 = vmatprep.subr.mxu0 0.0
      %2299 = vmatpush1.msra.mxu0 0.0
      %2300 = vmatprep.subr.mxu0 0.0
      %2301 = vmatpush1.msra.mxu0 0.0
      %2302 = vmatprep.subr.mxu0 0.0
      %2303 = vmatpush1.msra.mxu0 0.0
      %2304 = vmatprep.subr.mxu0 0.0
      %2305 = vmatpush1.msra.mxu0 0.0
      %2306 = vmatprep.subr.mxu0 0.0
      %2307 = vmatpush1.msra.mxu0 0.0
      %2308 = vmatprep.subr.mxu0 0.0
      %2309 = vmatpush1.msra.mxu0 0.0
      %2310 = vmatprep.subr.mxu0 0.0
      %2311 = vmatpush1.msra.mxu0 0.0
      %2312 = vmatprep.subr.mxu0 0.0
      %2313 = vmatpush1.msra.mxu0 0.0
      %2314 = vmatprep.subr.mxu0 0.0
      %2315 = vmatpush1.msra.mxu0 0.0
      %2316 = vmatprep.subr.mxu0 0.0
      %2317 = vmatpush1.msra.mxu0 0.0
      %2318 = vmatprep.subr.mxu0 0.0
      %2319 = vmatpush1.msra.mxu0 0.0
      %2320 = vmatprep.subr.mxu0 0.0
      %2321 = vmatpush1.msra.mxu0 0.0
      %2322 = vmatprep.subr.mxu0 0.0
      %2323 = vmatpush1.msra.mxu0 0.0
      %2324 = vmatprep.subr.mxu0 0.0
      %2325 = vmatpush1.msra.mxu0 0.0
      %2326 = vmatprep.subr.mxu0 0.0
      %2327 = vmatpush1.msra.mxu0 0.0
      %2328 = vmatprep.subr.mxu0 0.0
      %2329 = vmatpush1.msra.mxu0 0.0
      %2330 = vmatprep.subr.mxu0 0.0
      %2331 = vmatpush1.msra.mxu0 0.0
      %2332 = vmatprep.subr.mxu0 0.0
      %2333 = vmatpush1.msra.mxu0 0.0
      %2334 = vmatprep.subr.mxu0 0.0
      %2335 = vmatpush1.msra.mxu0 0.0
      %2336 = vmatprep.mubr.f32.mxu0 0.0
      %2337 = vmatmul.mubr.f32.gmra.mrb[0].mxu0 %v2249
      %v2338 = vpop.f32.mrb[0].mxu0
      %v2339 = vadd.f32 0.0, %v2338
      %v2340 = vpop.f32.mrb[0].mxu0
      %2341 = vmatprep.mubr.f32.mxu0 0.0
      %2342 = vmatmul.mubr.f32.gmra.mrb[0].mxu0 %v2252
      %v2343 = vpop.f32.mrb[0].mxu0
      %v2344 = vadd.f32 0.0, %v2343
      %v2345 = vpop.f32.mrb[0].mxu0
      %2346 = vmatprep.mubr.f32.mxu0 0.0
      %2347 = vmatmul.mubr.f32.gmra.mrb[0].mxu0 %v2255
      %v2348 = vpop.f32.mrb[0].mxu0
      %v2349 = vadd.f32 0.0, %v2348
      %v2350 = vpop.f32.mrb[0].mxu0
      %2351 = vmatprep.mubr.f32.mxu0 0.0
      %2352 = vmatmul.mubr.f32.gmra.mrb[0].mxu0 %v2258
      %v2353 = vpop.f32.mrb[0].mxu0
      %v2354 = vadd.f32 0.0, %v2353
      %v2355 = vpop.f32.mrb[0].mxu0
      %2356 = vmatprep.mubr.f32.mxu0 0.0
      %2357 = vmatmul.mubr.f32.gmra.mrb[0].mxu0 %v2261
      %v2358 = vpop.f32.mrb[0].mxu0
      %v2359 = vadd.f32 0.0, %v2358
      %v2360 = vpop.f32.mrb[0].mxu0
      %2361 = vmatprep.mubr.f32.mxu0 0.0
      %2362 = vmatmul.mubr.f32.gmra.mrb[0].mxu0 %v2264
      %v2363 = vpop.f32.mrb[0].mxu0
      %v2364 = vadd.f32 0.0, %v2363
      %v2365 = vpop.f32.mrb[0].mxu0
      %2366 = vmatprep.mubr.f32.mxu0 0.0
      %2367 = vmatmul.mubr.f32.gmra.mrb[0].mxu0 %v2267
      %v2368 = vpop.f32.mrb[0].mxu0
      %v2369 = vadd.f32 0.0, %v2368
      %v2370 = vpop.f32.mrb[0].mxu0
      %2371 = vmatprep.mubr.f32.mxu0 0.0
      %2372 = vmatmul.mubr.f32.gmra.mrb[0].mxu0 %v2270
      %v2373 = vpop.f32.mrb[0].mxu0
      %v2374 = vadd.f32 0.0, %v2373
      %v2375 = vpop.f32.mrb[0].mxu0
      %2376 = vdwg.mxu0
      %s2377 = scalar_lea.vmem %s197, 128
      %2378 = vst.msk [vmem:[%s2377] sm:$0xff] %vm1891, %v2339
      %2379 = vst.msk [vmem:[%s2377 + $0x8] sm:$0xff] %vm1891, %v2344
      %2380 = vst.msk [vmem:[%s2377 + $0x10] sm:$0xff] %vm1891, %v2349
      %2381 = vst.msk [vmem:[%s2377 + $0x18] sm:$0xff] %vm1891, %v2354
      %2382 = vst.msk [vmem:[%s2377 + $0x20] sm:$0xff] %vm1891, %v2359
      %2383 = vst.msk [vmem:[%s2377 + $0x28] sm:$0xff] %vm1891, %v2364
      %2384 = vst.msk [vmem:[%s2377 + $0x30] sm:$0xff] %vm1891, %v2369
      %2385 = vst.msk [vmem:[%s2377 + $0x38] sm:$0xff] %vm1891, %v2374
      %p2386 = scmp.lt.s32.totalorder %s15, 1
      %s2387 = scalar_select %p2386, %s15, 1
      %s2388 = smul.addr %s2387, 24
      %s2389 = smul.addr %s2388, 8
      %s2390 = scalar_lea.vmem %s4, %s2389
      // Predicated region
      $region37: #{model_forward.1} parent=35 // pred_check
        %p2391 = pneg %p122
      $region38: #{model_forward.1} parent=35 // pred_check_branch
        %2393 = sbr.rel (%p2391) target = $region40
      $region39: #{model_forward.1} parent=35 // pred_region
        _
      $region40: #{model_forward.1} parent=35 // pred_fallthru
        _
    $region36: #{model_forward.1} parent=5 // pred_fallthru
      _
    %p2394 = scmp.le.s32.totalorder 2, %s10
    // Predicated region
    $region41: #{model_forward.1} parent=5 // pred_check
      %p2395 = pneg %p2394
    $region42: #{model_forward.1} parent=5 // pred_check_branch
      %2397 = sbr.rel (%p2395) target = $region44
    $region43: #{model_forward.1} parent=5 // pred_region
      %s2398 = ssub.s32 %s10, 2
      // Predicated region
      $region45: #{model_forward.1} parent=43 // pred_check
        %p2399 = pneg %p128
      $region46: #{model_forward.1} parent=43 // pred_check_branch
        %2401 = sbr.rel (%p2399) target = $region48
      $region47: #{model_forward.1} parent=43 // pred_region
        %p2402 = scmp.lt.s32.totalorder %s16, 1
        %s2403 = scalar_select %p2402, %s16, 1
        %s2404 = smul.addr %s2403, 24
        %s2405 = smul.addr %s2404, 8
        %s2406 = scalar_lea.vmem %s4, %s2405
      $region48: #{model_forward.1} parent=43 // pred_fallthru
        _
    $region44: #{model_forward.1} parent=5 // pred_fallthru
      _
  $region6: #{model_forward.1} parent=0 // loop_footer
    %s14 = sadd.s32 1, %s10
  $region7: #{model_forward.1} parent=0 // loop_footer_branch
    %9 = sbr.rel target = $region3
  $region8: #{model_forward.1} parent=0 // loop_exit
    _

</llo_original>
